<compile_context>
chip_gen: v6e
topology: v6e:2x2x1
jax: 0.10.0
libtpu: 0.0.40
codegen_flags: <defaults>
</compile_context>

<pallas_src>
import functools

import jax
import jax.numpy as jnp
from jax import lax
from jax.experimental import pallas as pl
from jax.experimental.pallas import tpu as pltpu


_LANES = 128


def _selective_attention_kernel(sizes_ref, bags_ref, rel_ref, out_ref):
    bags = bags_ref[...]                      # (TB, S, H)  storage dtype
    rel = rel_ref[...]                        # (R,  H)     storage dtype
    sizes = sizes_ref[...]                    # (TB, 1)     int32

    TB, S, H = bags.shape
    R = rel.shape[0]

    # --- scores: ONE flattened 2-D MXU matmul; rel is never broadcast over TB.
    #   (TB*S, H) x (H, R) -> (TB*S, R), f32 accumulation.
    bags_2d = bags.reshape(TB * S, H)
    scores = lax.dot_general(
        bags_2d, rel,
        dimension_numbers=(((1,), (1,)), ((), ())),
        preferred_element_type=jnp.float32,
    ).reshape(TB, S, R)                       # (TB, S, R) f32

    # --- sentence mask as an additive bias built once at (TB, S, 1) and
    #     broadcast over R (R-fold fewer compares/selects than a full select).
    sent_idx = lax.broadcasted_iota(jnp.int32, (TB, S, 1), 1)
    bias = jnp.where(sent_idx < sizes[:, None, :], 0.0, -jnp.inf)
    scores = scores + bias.astype(jnp.float32)
    # NOTE: bags_size[b] == 0 yields NaN rows, matching torch.softmax on an
    # all -inf axis.

    # --- softmax over the sentence axis (torch dim=1), f32 throughout.
    m = jnp.max(scores, axis=1, keepdims=True)             # (TB, 1, R)
    e = jnp.exp(scores - m)                                 # masked -> 0
    denom = jnp.sum(e, axis=1, keepdims=True)               # (TB, 1, R)
    probs = e * pl.reciprocal(denom, approx=False)          # (TB, S, R)

    # --- sent_rep[b] = probs[b].T @ bags[b]: batched contraction over S,
    #     MXU operands in the storage dtype (bf16 when bags are bf16), f32 acc.
    sent_rep = lax.dot_general(
        probs.astype(bags.dtype), bags,
        dimension_numbers=(((1,), (1,)), ((0,), (0,))),
        preferred_element_type=jnp.float32,
    )                                          # (TB, R, H) f32

    out_ref[...] = sent_rep.astype(out_ref.dtype)


@functools.lru_cache(maxsize=None)
def _vmem_plan():
    """Per-generation (per-step block budget, vmem_limit_bytes).

    v5e/v6e TensorCores have 128 MiB VMEM (scoped default only 16/32 MiB);
    v7x-class cores have 64 MiB total.  Unknown chips get the conservative
    (v7x-safe) plan.
    """
    cap = None
    try:
        cap = int(getattr(pltpu.get_tpu_info(), "vmem_capacity_bytes", 0)) or None
    except Exception:  # query unavailable (e.g. interpret mode)
        cap = None
    if cap is None or cap <= (64 << 20):
        return 24 << 20, 48 << 20           # v7x-class / unknown: leave headroom
    return 64 << 20, 96 << 20               # v5e / v6e: raise above scoped default


def _per_bag_vmem_bytes(S, H, R, bags_itemsize, out_itemsize, bags_buffers):
    """Rough per-bag VMEM footprint of one pipelined grid step."""
    bags_blk = S * H * bags_itemsize * bags_buffers      # pipelined bags input
    out_blk = R * H * out_itemsize * 2                   # double-buffered output
    sizes_blk = _LANES * 4 * 2                           # (TB, 1) i32, lane-padded
    work = (S * _LANES + R * H) * 4 * 2                  # f32 scores/probs/acc values
    return bags_blk + out_blk + sizes_blk + work


def _pick_block_bags(batch, per_bag_bytes, budget_bytes, min_steps=2):
    """Largest TB that divides the batch, satisfies the (8, 128) tiling rule for
    the (TB, 1) sizes block, fits the VMEM budget and -- when possible -- leaves
    at least `min_steps` grid steps (pipelining; v7x's two TensorCores)."""
    tiled = [tb for tb in range(1, batch + 1)
             if batch % tb == 0 and (tb % 8 == 0 or tb == batch)]
    fits = [tb for tb in tiled if tb * per_bag_bytes <= budget_bytes]
    pool = fits if fits else tiled[:1]       # smallest legal tile if nothing fits
    multi = [tb for tb in pool if batch // tb >= min_steps]
    return max(multi) if multi else max(pool)


@functools.partial(jax.jit,
                   static_argnames=("block_bags", "out_dtype", "bags_buffers"))
def selective_attention(bags, bags_size, relation_embeds, *,
                        block_bags=None, out_dtype=None, bags_buffers=2):
    B, S, H = bags.shape
    R, H_r = relation_embeds.shape
    assert H_r == H, "relation_embeds hidden dim must match bags"
    out_dtype = bags.dtype if out_dtype is None else jnp.dtype(out_dtype)

    block_budget, vmem_limit = _vmem_plan()
    per_bag = _per_bag_vmem_bytes(
        S, H, R,
        jnp.dtype(bags.dtype).itemsize, jnp.dtype(out_dtype).itemsize,
        bags_buffers)
    fixed = 2 * R * H * jnp.dtype(relation_embeds.dtype).itemsize + (2 << 20)
    if block_bags is None:
        TB = _pick_block_bags(B, per_bag, max(block_budget - fixed, 0))
    else:
        TB = int(block_bags)
    assert B % TB == 0, "block_bags must divide the batch dimension"
    assert TB % 8 == 0 or TB == B, "block_bags must be 8-aligned or the full batch"
    grid = (B // TB,)

    # TODO(synk): move bags_size into SMEM via PrefetchScalarGridSpec to drop the
    # lane-padded (TB, 1) VMEM block and the TB % 8 constraint (low priority).
    sizes2d = bags_size.astype(jnp.int32).reshape(B, 1)

    bags_spec_kwargs = {}
    if bags_buffers != 2:                     # extra buffering only if requested
        bags_spec_kwargs["pipeline_mode"] = pl.Buffered(bags_buffers)
    bags_spec = pl.BlockSpec((TB, S, H), lambda i: (i, 0, 0), **bags_spec_kwargs)

    cost = pl.CostEstimate(
        flops=4 * B * S * R * H,                              # two matmuls
        transcendentals=B * S * R + B * R,                    # exp + reciprocal
        bytes_accessed=(B * S * H * jnp.dtype(bags.dtype).itemsize
                        + R * H * jnp.dtype(relation_embeds.dtype).itemsize
                        + B * R * H * jnp.dtype(out_dtype).itemsize
                        + B * 4),
    )

    return pl.pallas_call(
        _selective_attention_kernel,
        grid=grid,
        in_specs=[
            pl.BlockSpec((TB, 1), lambda i: (i, 0)),          # bag sizes
            bags_spec,                                        # bag tile
            pl.BlockSpec((R, H), lambda i: (0, 0)),           # relations (shared)
        ],
        out_specs=pl.BlockSpec((TB, R, H), lambda i: (i, 0, 0)),
        out_shape=jax.ShapeDtypeStruct((B, R, H), out_dtype),
        compiler_params=pltpu.CompilerParams(
            dimension_semantics=("parallel",),
            vmem_limit_bytes=vmem_limit,
        ),
        cost_estimate=cost,
    )(sizes2d, bags, relation_embeds)


def selective_attention_ref(bags, bags_size, relation_embeds):
    """Pure-JAX reference mirroring the PyTorch forward."""
    S = bags.shape[1]
    idx = jnp.arange(S)[None, :, None]
    mask = idx < bags_size[:, None, None]
    scores = jnp.einsum("bsh,rh->bsr", bags, relation_embeds)
    scores = jnp.where(mask, scores, -jnp.inf)
    probs = jax.nn.softmax(scores, axis=1)
    return jnp.einsum("bsr,bsh->brh", probs, bags)


if __name__ == "__main__":
    key = jax.random.PRNGKey(0)
    k1, k2, k3 = jax.random.split(key, 3)

    # Small but TPU-friendly shapes: H (lanes) = 128, R/S sublane aligned.
    B, S, H, R = 32, 8, 128, 8

    bags = jax.random.normal(k1, (B, S, H), dtype=jnp.float32)
    relation_embeds = jax.random.normal(k2, (R, H), dtype=jnp.float32)
    bags_size = jax.random.randint(k3, (B,), 1, S + 1).astype(jnp.int32)

    # --- f32 storage path (exact parity with the PyTorch module). TB is picked
    #     automatically from the per-generation VMEM budget (>= 2 grid steps).
    out = jax.block_until_ready(selective_attention(bags, bags_size, relation_embeds))
    ref = selective_attention_ref(bags, bags_size, relation_embeds)
    assert out.shape == (B, R, H)
    assert jnp.allclose(out, ref, atol=2e-3, rtol=2e-3), "f32 mismatch vs reference"

    # --- bf16-in-HBM storage path (bandwidth lever): compare against the
    #     reference evaluated on the same bf16-rounded operands.
    bags_bf16 = bags.astype(jnp.bfloat16)
    rel_bf16 = relation_embeds.astype(jnp.bfloat16)
    out_bf16 = jax.block_until_ready(
        selective_attention(bags_bf16, bags_size, rel_bf16))
    ref_bf16 = selective_attention_ref(
        bags_bf16.astype(jnp.float32), bags_size, rel_bf16.astype(jnp.float32))
    assert out_bf16.dtype == jnp.bfloat16
    assert jnp.allclose(out_bf16.astype(jnp.float32), ref_bf16,
                        atol=5e-2, rtol=5e-2), "bf16 mismatch vs reference"

    print("KERNEL_OK")
</pallas_src>

<mosaic_0001>
module attributes {stable_mosaic.version = 11 : i64} {
  func.func @_selective_attention_kernel(%arg0: i32, %arg1: memref<16x1xi32, #tpu.memory_space<vmem>>, %arg2: memref<16x8x128xf32, #tpu.memory_space<vmem>>, %arg3: memref<8x128xf32, #tpu.memory_space<vmem>>, %arg4: memref<16x8x128xf32, #tpu.memory_space<vmem>>) attributes {dimension_semantics = [#tpu.dimension_semantics<parallel>], iteration_bounds = array<i64: 2>, scalar_prefetch = 0 : i64, scratch_operands = 0 : i64, tpu.core_type = #tpu.core_type<tc>, window_params = [{transform_indices = @transform_0, window_bounds = array<i64: 16, 1>}, {transform_indices = @transform_1, window_bounds = array<i64: 16, 8, 128>}, {pipeline_mode = #tpu.pipeline_mode<synchronous>, transform_indices = @transform_2, window_bounds = array<i64: 8, 128>}, {transform_indices = @transform_3, window_bounds = array<i64: 16, 8, 128>}]} {
    %c0 = arith.constant 0 : index
    %c0_0 = arith.constant 0 : index
    %c0_1 = arith.constant 0 : index
    %0 = vector.load %arg2[%c0, %c0_0, %c0_1] : memref<16x8x128xf32, #tpu.memory_space<vmem>>, vector<16x8x128xf32>
    %c0_2 = arith.constant 0 : index
    %c0_3 = arith.constant 0 : index
    %1 = vector.load %arg3[%c0_2, %c0_3] : memref<8x128xf32, #tpu.memory_space<vmem>>, vector<8x128xf32>
    %c0_4 = arith.constant 0 : index
    %c0_5 = arith.constant 0 : index
    %2 = vector.load %arg1[%c0_4, %c0_5] : memref<16x1xi32, #tpu.memory_space<vmem>>, vector<16x1xi32>
    %3 = vector.shape_cast %0 : vector<16x8x128xf32> to vector<128x128xf32>
    %cst = arith.constant dense<0.000000e+00> : vector<128x8xf32>
    %4 = tpu.matmul %3, %1, %cst {dimension_numbers = #tpu.dot_dimension_numbers<[1], [1], [0], [0], [0, 0, 1, 0], [], []>} : vector<128x128xf32>, vector<8x128xf32>, vector<128x8xf32> -> vector<128x8xf32>
    %5 = vector.shape_cast %4 : vector<128x8xf32> to vector<16x8x8xf32>
    %6 = tpu.iota {dimensions = array<i32: 1>} : vector<16x8x1xi32>
    %7 = vector.shape_cast %2 : vector<16x1xi32> to vector<16x1x1xi32>
    %8 = vector.broadcast %7 : vector<16x1x1xi32> to vector<16x8x1xi32>
    %9 = arith.cmpi slt, %6, %8 : vector<16x8x1xi32>
    %cst_6 = arith.constant 0.000000e+00 : f32
    %cst_7 = arith.constant 0xFF800000 : f32
    %10 = vector.broadcast %cst_6 : f32 to vector<16x8x1xf32>
    %11 = vector.broadcast %cst_7 : f32 to vector<16x8x1xf32>
    %12 = arith.select %9, %10, %11 : vector<16x8x1xi1>, vector<16x8x1xf32>
    %13 = vector.broadcast %12 : vector<16x8x1xf32> to vector<16x8x8xf32>
    %14 = arith.addf %5, %13 : vector<16x8x8xf32>
    %cst_8 = arith.constant dense<0xFF800000> : vector<16x8xf32>
    %15 = vector.multi_reduction <maximumf>, %14, %cst_8 [1] : vector<16x8x8xf32> to vector<16x8xf32>
    %16 = vector.shape_cast %15 : vector<16x8xf32> to vector<16x1x8xf32>
    %17 = vector.broadcast %16 : vector<16x1x8xf32> to vector<16x8x8xf32>
    %18 = arith.subf %14, %17 : vector<16x8x8xf32>
    %19 = math.exp %18 : vector<16x8x8xf32>
    %cst_9 = arith.constant dense<0.000000e+00> : vector<16x8xf32>
    %20 = vector.multi_reduction <add>, %19, %cst_9 [1] : vector<16x8x8xf32> to vector<16x8xf32>
    %21 = vector.shape_cast %20 : vector<16x8xf32> to vector<16x1x8xf32>
    %22 = tpu.reciprocal %21 : vector<16x1x8xf32> -> vector<16x1x8xf32>
    %23 = vector.broadcast %22 : vector<16x1x8xf32> to vector<16x8x8xf32>
    %24 = arith.mulf %19, %23 : vector<16x8x8xf32>
    %cst_10 = arith.constant dense<0.000000e+00> : vector<16x8x128xf32>
    %25 = tpu.matmul %24, %0, %cst_10 {dimension_numbers = #tpu.dot_dimension_numbers<[1], [1], [2], [2], [0, 0, 0, 2, 1, 2], [0], [0]>} : vector<16x8x8xf32>, vector<16x8x128xf32>, vector<16x8x128xf32> -> vector<16x8x128xf32>
    %c0_11 = arith.constant 0 : index
    %c0_12 = arith.constant 0 : index
    %c0_13 = arith.constant 0 : index
    %26 = vector.load %arg4[%c0_11, %c0_12, %c0_13] : memref<16x8x128xf32, #tpu.memory_space<vmem>>, vector<16x8x128xf32>
    tpu.vector_store %arg4[%c0_11, %c0_12, %c0_13], %25 {strides = array<i32>} : memref<16x8x128xf32, #tpu.memory_space<vmem>>, vector<16x8x128xf32>,
    return
  }
  func.func @transform_0(%arg0: i32) -> (i32, i32) {
    %c0_i32 = arith.constant 0 : i32
    %c0_i32_0 = arith.constant 0 : i32
    return %arg0, %c0_i32 : i32, i32
  }
  func.func @transform_1(%arg0: i32) -> (i32, i32, i32) {
    %c0_i32 = arith.constant 0 : i32
    %c0_i32_0 = arith.constant 0 : i32
    %c0_i32_1 = arith.constant 0 : i32
    return %arg0, %c0_i32, %c0_i32_0 : i32, i32, i32
  }
  func.func @transform_2(%arg0: i32) -> (i32, i32) {
    %c0_i32 = arith.constant 0 : i32
    %c0_i32_0 = arith.constant 0 : i32
    %c0_i32_1 = arith.constant 0 : i32
    return %c0_i32, %c0_i32_0 : i32, i32
  }
  func.func @transform_3(%arg0: i32) -> (i32, i32, i32) {
    %c0_i32 = arith.constant 0 : i32
    %c0_i32_0 = arith.constant 0 : i32
    %c0_i32_1 = arith.constant 0 : i32
    return %arg0, %c0_i32, %c0_i32_0 : i32, i32, i32
  }
}

</mosaic_0001>

<llo_original>
// kernel: selective_attention.1
$region0: #{selective_attention.1}
  #allocation0 [shape = 'u32[]', space=smem, size = 0x4, offset = 0x4, fixed_abs, tag = 'smem constant byte address 0x4 - core index']
  #allocation1 [shape = 'u32[144,128]{1,0:T(1,128)}', space=vmem, size = 0x12000, scoped, tag = 'internal scratch']
  %s0 = inlined_call_operand.vmem [shape: s32[32,1], index: 0, kind: input, shape index: {}]
  %s1 = inlined_call_operand.hbm [shape: f32[32,8,128], index: 1, kind: input, shape index: {}]
  %s2 = inlined_call_operand.vmem [shape: f32[8,128], index: 2, kind: input, shape index: {}]
  %s3 = inlined_call_operand.hbm [shape: f32[32,8,128], index: 3, kind: output, shape index: {}]
  %s4 = sld [smem:[#allocation0]]
  $region49: #{selective_attention.1} parent=0
    _
  %s6 = ssub.s32 1, %s4
  %s7 = scalar_select 0, %s6, %s4
  $region1: #{selective_attention.1} parent=0
    #allocation2 [shape = 'u8[131072]{0}', space=vmem, size = 0x20000, scoped, tag = 'input window, operand 1']
    #allocation3 [shape = 's32[2]{0}', space=sflag, size = 0x8, scoped, tag = 'scoped memory for selective_attention.1']
    #allocation4 [shape = 's32[2]{0}', space=sflag, size = 0x8, scoped, tag = 'scoped memory for selective_attention.1']
    #allocation5 [shape = 'u8[131072]{0}', space=vmem, size = 0x20000, scoped, tag = 'output window, operand 0']
    %8 = vsyncpa [#allocation3], 0
    %s9 = scalar_lea.sflag [#allocation3], 1
    %10 = vsyncpa %s9, 0
    %11 = vsyncpa [#allocation4], 0
    %s12 = scalar_lea.sflag [#allocation4], 1
    %13 = vsyncpa %s12, 0
    loop: start=0, step=1, limit=4
    $region2: #{selective_attention.1} parent=1 // loop_pre_header
      _
    $region3: #{selective_attention.1} parent=1 // loop_header
      %s15 = sphi 0, %s19
      %p16 = scmp.ge.s32.totalorder %s15, 4
      %s25 = sphi 0, %s27
      %s28 = sphi 0, %s25
      %s29 = sphi 0, %s28
      %s45 = sphi 0, %s29
      %s51 = sphi 0, %s53
      %s54 = sphi 0, %s51
      %s55 = sphi 0, %s54
      %s71 = sphi 0, %s55
      %s75 = sphi 0, %s75
      %s77 = sphi 0, %s75
      %s78 = sphi 0, %s77
      %s92 = sphi 0, %s78
      %s98 = sphi 0, %s100
      %s101 = sphi 0, %s98
      %s102 = sphi 0, %s101
      %s118 = sphi 0, %s102
    $region4: #{selective_attention.1} parent=1 // loop_header_branch
      %18 = sbr.rel (%p16) target = $region8
    $region5: #{selective_attention.1} parent=1 // loop_body
      %s20 = ssub.s32 %s15, 1
      %s21 = ssub.s32 %s15, 2
      %s22 = sadd.s32 %s15, 1
      %s23 = ssub.s32 %s15, %s22
      %p24 = scmp.eq.s32.totalorder %s23, 0
      %s26 = sadd.s32 %s25, 1
      %s27 = scalar_select %p24, %s25, %s26
      %p30 = pneg %p24
      %p31 = scmp.eq.s32.totalorder %s15, 1
      %p32 = por %p30, %p31
      %p33 = scmp.ne.s32.totalorder %s25, %s28
      %p34 = scmp.eq.s32.totalorder %s15, 0
      %p35 = por %p33, %p34
      %p36 = scmp.ne.s32.totalorder %s25, %s28
      %p37 = scmp.eq.s32.totalorder %s20, 1
      %p38 = por %p36, %p37
      %p39 = scmp.ne.s32.totalorder %s28, %s29
      %p40 = scmp.eq.s32.totalorder %s20, 0
      %p41 = por %p39, %p40
      %p42 = scmp.ne.s32.totalorder %s28, %s29
      %p43 = scmp.eq.s32.totalorder %s21, 1
      %p44 = por %p42, %p43
      %p46 = scmp.ne.s32.totalorder %s29, %s45
      %p47 = scmp.eq.s32.totalorder %s21, 0
      %p48 = por %p46, %p47
      %s49 = ssub.s32 %s15, %s22
      %p50 = scmp.eq.s32.totalorder %s49, 0
      %s52 = sadd.s32 %s51, 1
      %s53 = scalar_select %p50, %s51, %s52
      %p56 = pneg %p50
      %p57 = scmp.eq.s32.totalorder %s15, 1
      %p58 = por %p56, %p57
      %p59 = scmp.ne.s32.totalorder %s51, %s54
      %p60 = scmp.eq.s32.totalorder %s15, 0
      %p61 = por %p59, %p60
      %p62 = scmp.ne.s32.totalorder %s51, %s54
      %p63 = scmp.eq.s32.totalorder %s20, 1
      %p64 = por %p62, %p63
      %p65 = scmp.ne.s32.totalorder %s54, %s55
      %p66 = scmp.eq.s32.totalorder %s20, 0
      %p67 = por %p65, %p66
      %p68 = scmp.ne.s32.totalorder %s54, %s55
      %p69 = scmp.eq.s32.totalorder %s21, 1
      %p70 = por %p68, %p69
      %p72 = scmp.ne.s32.totalorder %s55, %s71
      %p73 = scmp.eq.s32.totalorder %s21, 0
      %p74 = por %p72, %p73
      %s76 = sadd.s32 %s75, 1
      %p79 = scmp.eq.s32.totalorder %s15, 1
      %p80 = scmp.ne.s32.totalorder %s75, %s77
      %p81 = scmp.eq.s32.totalorder %s15, 0
      %p82 = por %p80, %p81
      %p83 = scmp.ne.s32.totalorder %s75, %s77
      %p84 = scmp.eq.s32.totalorder %s20, 1
      %p85 = por %p83, %p84
      %p86 = scmp.ne.s32.totalorder %s77, %s78
      %p87 = scmp.eq.s32.totalorder %s20, 0
      %p88 = por %p86, %p87
      %p89 = scmp.ne.s32.totalorder %s77, %s78
      %p90 = scmp.eq.s32.totalorder %s21, 1
      %p91 = por %p89, %p90
      %p93 = scmp.ne.s32.totalorder %s78, %s92
      %p94 = scmp.eq.s32.totalorder %s21, 0
      %p95 = por %p93, %p94
      %s96 = ssub.s32 %s15, %s22
      %p97 = scmp.eq.s32.totalorder %s96, 0
      %s99 = sadd.s32 %s98, 1
      %s100 = scalar_select %p97, %s98, %s99
      %p103 = pneg %p97
      %p104 = scmp.eq.s32.totalorder %s15, 1
      %p105 = por %p103, %p104
      %p106 = scmp.ne.s32.totalorder %s98, %s101
      %p107 = scmp.eq.s32.totalorder %s15, 0
      %p108 = por %p106, %p107
      %p109 = scmp.ne.s32.totalorder %s98, %s101
      %p110 = scmp.eq.s32.totalorder %s20, 1
      %p111 = por %p109, %p110
      %p112 = scmp.ne.s32.totalorder %s101, %s102
      %p113 = scmp.eq.s32.totalorder %s20, 0
      %p114 = por %p112, %p113
      %p115 = scmp.ne.s32.totalorder %s101, %s102
      %p116 = scmp.eq.s32.totalorder %s21, 1
      %p117 = por %p115, %p116
      %p119 = scmp.ne.s32.totalorder %s102, %s118
      %p120 = scmp.eq.s32.totalorder %s21, 0
      %p121 = por %p119, %p120
      %p122 = scmp.le.s32.totalorder 1, %s15
      %p123 = scmp.lt.s32.totalorder %s15, 3
      %p124 = pnand %p122, %p123
      %p125 = pneg %p124
      // Predicated region
      $region9: #{selective_attention.1} parent=5 // pred_check
        _
      $region10: #{selective_attention.1} parent=5 // pred_check_branch
        %127 = sbr.rel (%p124) target = $region12
      $region11: #{selective_attention.1} parent=5 // pred_region
        %s128 = ssub.s32 %s15, 1
        // Predicated region
        $region13: #{selective_attention.1} parent=11 // pred_check
          %p129 = pneg %p88
        $region14: #{selective_attention.1} parent=11 // pred_check_branch
          %131 = sbr.rel (%p129) target = $region16
        $region15: #{selective_attention.1} parent=11 // pred_region
          _
        $region16: #{selective_attention.1} parent=11 // pred_fallthru
          _
      $region12: #{selective_attention.1} parent=5 // pred_fallthru
        _
      %p132 = scmp.lt.s32.totalorder %s15, 2
      // Predicated region
      $region17: #{selective_attention.1} parent=5 // pred_check
        %p133 = pneg %p132
      $region18: #{selective_attention.1} parent=5 // pred_check_branch
        %135 = sbr.rel (%p133) target = $region20
      $region19: #{selective_attention.1} parent=5 // pred_region
        // Predicated region
        $region21: #{selective_attention.1} parent=19 // pred_check
          %p136 = pneg %p35
        $region22: #{selective_attention.1} parent=19 // pred_check_branch
          %138 = sbr.rel (%p136) target = $region24
        $region23: #{selective_attention.1} parent=19 // pred_region
          %s139 = smul.u32 2, %s15
          %p140 = scmp.lt.s32.totalorder %s139, 3
          %s141 = scalar_select %p140, %s139, 3
          %s142 = smul.addr %s141, 8
          %s143 = scalar_lea.vmem %s0, %s142
          %s144 = smul.u32 2, %s15
        $region24: #{selective_attention.1} parent=19 // pred_fallthru
          _
        // Predicated region
        $region25: #{selective_attention.1} parent=19 // pred_check
          %p145 = pneg %p61
        $region26: #{selective_attention.1} parent=19 // pred_check_branch
          %147 = sbr.rel (%p145) target = $region28
        $region27: #{selective_attention.1} parent=19 // pred_region
          %s148 = sand.u32 %s51, 1
          %s149 = scalar_lea.sflag [#allocation3], %s148
          %s150 = sand.u32 %s51, 1
          %s151 = smul.addr %s150, 128
          %s152 = scalar_lea.vmem [#allocation2], %s151
          %s153 = smul.u32 16, %s15
          %s155 = ssub.s32 2048, 2048
          %156 = vsyncadd %s149, %s155
          %s157 = smul.addr %s153, 128
          %s158 = scalar_lea.hbm %s1, %s157
          %s159 = sshll.u32 %s152, 4
          %s160 = int_to_ptr.vmem [resolvable:$true] %s159
          %165 = dma.hbm_to_vmem [thread:$0]  %s158, 2048, %s160, %s149, 128, 128, 8
        $region28: #{selective_attention.1} parent=19 // pred_fallthru
          _
      $region20: #{selective_attention.1} parent=5 // pred_fallthru
        _
      %p166 = scmp.le.s32.totalorder 1, %s15
      %p167 = scmp.lt.s32.totalorder %s15, 3
      %p168 = pnand %p166, %p167
      %p169 = pneg %p168
      // Predicated region
      $region29: #{selective_attention.1} parent=5 // pred_check
        _
      $region30: #{selective_attention.1} parent=5 // pred_check_branch
        %171 = sbr.rel (%p168) target = $region32
      $region31: #{selective_attention.1} parent=5 // pred_region
        %s172 = ssub.s32 %s15, 1
        %s173 = sand.u32 %s54, 1
        %s174 = scalar_lea.sflag [#allocation3], %s173
        %s175 = sand.u32 %s54, 1
        %s176 = smul.addr %s175, 128
        %s177 = scalar_lea.vmem [#allocation2], %s176
        // Predicated region
        $region33: #{selective_attention.1} parent=31 // pred_check
          %p178 = pneg %p67
        $region34: #{selective_attention.1} parent=31 // pred_check_branch
          %180 = sbr.rel (%p178) target = $region36
        $region35: #{selective_attention.1} parent=31 // pred_region
          %181 = dma.done %s174, 2048
        $region36: #{selective_attention.1} parent=31 // pred_fallthru
          _
        %s182 = smul.u32 2, %s20
        %p183 = scmp.lt.s32.totalorder %s182, 3
        %s184 = scalar_select %p183, %s182, 3
        %s185 = smul.addr %s184, 8
        %s186 = scalar_lea.vmem %s0, %s185
        %p187 = pneg %p41
        %p188 = pneg %p38
        %s189 = sand.u32 %s54, 1
        %s190 = scalar_lea.sflag [#allocation3], %s189
        %s191 = sand.u32 %s54, 1
        %s192 = smul.addr %s191, 128
        %s193 = scalar_lea.vmem [#allocation2], %s192
        %p194 = pneg %p67
        %p195 = pneg %p64
        %p196 = pneg %p88
        %p197 = pneg %p85
        %p198 = pneg %p114
        %p199 = pneg %p111
        %s200 = sand.u32 %s101, 1
        %s201 = scalar_lea.sflag [#allocation4], %s200
        %s202 = sand.u32 %s101, 1
        %s203 = smul.addr %s202, 128
        %s204 = scalar_lea.vmem [#allocation5], %s203
        %s205 = smul.u32 2, %s20
        %p206 = scmp.lt.s32.totalorder %s205, 3
        %s207 = scalar_select %p206, %s205, 3
        %s208 = smul.addr %s207, 8
        %s209 = scalar_lea.vmem %s0, %s208
        %s210 = smul.u32 2, %s20
        %s211 = smul.u32 16, %s20
        %s212 = smul.u32 16, %s20
        %v213 = vld [vmem:[%s177] sm:$0xff]
        %v214 = vld [vmem:[%s177 + $0x8] sm:$0xff]
        %v215 = vld [vmem:[%s177 + $0x10] sm:$0xff]
        %v216 = vld [vmem:[%s177 + $0x18] sm:$0xff]
        %v217 = vld [vmem:[%s177 + $0x20] sm:$0xff]
        %v218 = vld [vmem:[%s177 + $0x28] sm:$0xff]
        %v219 = vld [vmem:[%s177 + $0x30] sm:$0xff]
        %v220 = vld [vmem:[%s177 + $0x38] sm:$0xff]
        %v221 = vld [vmem:[%s177 + $0x40] sm:$0xff]
        %v222 = vld [vmem:[%s177 + $0x48] sm:$0xff]
        %v223 = vld [vmem:[%s177 + $0x50] sm:$0xff]
        %v224 = vld [vmem:[%s177 + $0x58] sm:$0xff]
        %v225 = vld [vmem:[%s177 + $0x60] sm:$0xff]
        %v226 = vld [vmem:[%s177 + $0x68] sm:$0xff]
        %v227 = vld [vmem:[%s177 + $0x70] sm:$0xff]
        %v228 = vld [vmem:[%s177 + $0x78] sm:$0xff]
        %v229 = vld [vmem:[%s2] sm:$0xff]
        %v230 = vld [vmem:[%s209] sm:$0xff]
        %v231 = vld [vmem:[%s209 + $0x8] sm:$0xff]
        %232 = vmatprep.subr.mxu0 0.0
        %233 = vmatpush1.xpose.msra.mxu0 0.0
        %234 = vmatprep.subr.mxu0 0.0
        %235 = vmatpush1.xpose.msra.mxu0 0.0
        %236 = vmatprep.subr.mxu0 0.0
        %237 = vmatpush1.xpose.msra.mxu0 0.0
        %238 = vmatprep.subr.mxu0 0.0
        %239 = vmatpush1.xpose.msra.mxu0 0.0
        %240 = vmatprep.subr.mxu0 0.0
        %241 = vmatpush1.xpose.msra.mxu0 0.0
        %242 = vmatprep.subr.mxu0 0.0
        %243 = vmatpush1.xpose.msra.mxu0 0.0
        %244 = vmatprep.subr.mxu0 0.0
        %245 = vmatpush1.xpose.msra.mxu0 0.0
        %246 = vmatprep.subr.mxu0 0.0
        %247 = vmatpush1.xpose.msra.mxu0 0.0
        %248 = vmatprep.subr.mxu0 0.0
        %249 = vmatpush1.xpose.msra.mxu0 0.0
        %250 = vmatprep.subr.mxu0 0.0
        %251 = vmatpush1.xpose.msra.mxu0 0.0
        %252 = vmatprep.subr.mxu0 0.0
        %253 = vmatpush1.xpose.msra.mxu0 0.0
        %254 = vmatprep.subr.mxu0 0.0
        %255 = vmatpush1.xpose.msra.mxu0 0.0
        %256 = vmatprep.subr.mxu0 0.0
        %257 = vmatpush1.xpose.msra.mxu0 0.0
        %258 = vmatprep.subr.mxu0 0.0
        %259 = vmatpush1.xpose.msra.mxu0 0.0
        %260 = vmatprep.subr.mxu0 0.0
        %261 = vmatpush1.xpose.msra.mxu0 0.0
        %262 = vmatprep.subr.mxu0 0.0
        %263 = vmatpush1.xpose.msra.mxu0 %v229
        %264 = vmatprep.subr.mxu0 0.0
        %265 = vmatpush2.xpose.msra.mxu0 0.0
        %266 = vmatprep.subr.mxu0 0.0
        %267 = vmatpush2.xpose.msra.mxu0 0.0
        %268 = vmatprep.subr.mxu0 0.0
        %269 = vmatpush2.xpose.msra.mxu0 0.0
        %270 = vmatprep.subr.mxu0 0.0
        %271 = vmatpush2.xpose.msra.mxu0 0.0
        %272 = vmatprep.subr.mxu0 0.0
        %273 = vmatpush2.xpose.msra.mxu0 0.0
        %274 = vmatprep.subr.mxu0 0.0
        %275 = vmatpush2.xpose.msra.mxu0 0.0
        %276 = vmatprep.subr.mxu0 0.0
        %277 = vmatpush2.xpose.msra.mxu0 0.0
        %278 = vmatprep.subr.mxu0 0.0
        %279 = vmatpush2.xpose.msra.mxu0 0.0
        %280 = vmatprep.subr.mxu0 0.0
        %281 = vmatpush2.xpose.msra.mxu0 0.0
        %282 = vmatprep.subr.mxu0 0.0
        %283 = vmatpush2.xpose.msra.mxu0 0.0
        %284 = vmatprep.subr.mxu0 0.0
        %285 = vmatpush2.xpose.msra.mxu0 0.0
        %286 = vmatprep.subr.mxu0 0.0
        %287 = vmatpush2.xpose.msra.mxu0 0.0
        %288 = vmatprep.subr.mxu0 0.0
        %289 = vmatpush2.xpose.msra.mxu0 0.0
        %290 = vmatprep.subr.mxu0 0.0
        %291 = vmatpush2.xpose.msra.mxu0 0.0
        %292 = vmatprep.subr.mxu0 0.0
        %293 = vmatpush2.xpose.msra.mxu0 0.0
        %294 = vmatprep.subr.mxu0 0.0
        %295 = vmatpush2.xpose.msra.mxu0 0.0
        %296 = vmatprep.mubr.f32.mxu0 0.0
        %297 = vmatmul.mubr.f32.gmra.mxu0 %v213
        %v298 = vpop.f32.mrf.mxu0
        %v299 = vadd.f32 0.0, %v298
        %v300 = vpop.f32.mrf.mxu0
        %301 = vmatprep.mubr.f32.mxu0 0.0
        %302 = vmatmul.mubr.f32.gmra.mxu0 %v214
        %v303 = vpop.f32.mrf.mxu0
        %v304 = vadd.f32 0.0, %v303
        %v305 = vpop.f32.mrf.mxu0
        %306 = vmatprep.mubr.f32.mxu0 0.0
        %307 = vmatmul.mubr.f32.gmra.mxu0 %v215
        %v308 = vpop.f32.mrf.mxu0
        %v309 = vadd.f32 0.0, %v308
        %v310 = vpop.f32.mrf.mxu0
        %311 = vmatprep.mubr.f32.mxu0 0.0
        %312 = vmatmul.mubr.f32.gmra.mxu0 %v216
        %v313 = vpop.f32.mrf.mxu0
        %v314 = vadd.f32 0.0, %v313
        %v315 = vpop.f32.mrf.mxu0
        %316 = vmatprep.mubr.f32.mxu0 0.0
        %317 = vmatmul.mubr.f32.gmra.mxu0 %v217
        %v318 = vpop.f32.mrf.mxu0
        %v319 = vadd.f32 0.0, %v318
        %v320 = vpop.f32.mrf.mxu0
        %321 = vmatprep.mubr.f32.mxu0 0.0
        %322 = vmatmul.mubr.f32.gmra.mxu0 %v218
        %v323 = vpop.f32.mrf.mxu0
        %v324 = vadd.f32 0.0, %v323
        %v325 = vpop.f32.mrf.mxu0
        %326 = vmatprep.mubr.f32.mxu0 0.0
        %327 = vmatmul.mubr.f32.gmra.mxu0 %v219
        %v328 = vpop.f32.mrf.mxu0
        %v329 = vadd.f32 0.0, %v328
        %v330 = vpop.f32.mrf.mxu0
        %331 = vmatprep.mubr.f32.mxu0 0.0
        %332 = vmatmul.mubr.f32.gmra.mxu0 %v220
        %v333 = vpop.f32.mrf.mxu0
        %v334 = vadd.f32 0.0, %v333
        %v335 = vpop.f32.mrf.mxu0
        %336 = vmatprep.mubr.f32.mxu0 0.0
        %337 = vmatmul.mubr.f32.gmra.mxu0 %v221
        %v338 = vpop.f32.mrf.mxu0
        %v339 = vadd.f32 0.0, %v338
        %v340 = vpop.f32.mrf.mxu0
        %341 = vmatprep.mubr.f32.mxu0 0.0
        %342 = vmatmul.mubr.f32.gmra.mxu0 %v222
        %v343 = vpop.f32.mrf.mxu0
        %v344 = vadd.f32 0.0, %v343
        %v345 = vpop.f32.mrf.mxu0
        %346 = vmatprep.mubr.f32.mxu0 0.0
        %347 = vmatmul.mubr.f32.gmra.mxu0 %v223
        %v348 = vpop.f32.mrf.mxu0
        %v349 = vadd.f32 0.0, %v348
        %v350 = vpop.f32.mrf.mxu0
        %351 = vmatprep.mubr.f32.mxu0 0.0
        %352 = vmatmul.mubr.f32.gmra.mxu0 %v224
        %v353 = vpop.f32.mrf.mxu0
        %v354 = vadd.f32 0.0, %v353
        %v355 = vpop.f32.mrf.mxu0
        %356 = vmatprep.mubr.f32.mxu0 0.0
        %357 = vmatmul.mubr.f32.gmra.mxu0 %v225
        %v358 = vpop.f32.mrf.mxu0
        %v359 = vadd.f32 0.0, %v358
        %v360 = vpop.f32.mrf.mxu0
        %361 = vmatprep.mubr.f32.mxu0 0.0
        %362 = vmatmul.mubr.f32.gmra.mxu0 %v226
        %v363 = vpop.f32.mrf.mxu0
        %v364 = vadd.f32 0.0, %v363
        %v365 = vpop.f32.mrf.mxu0
        %366 = vmatprep.mubr.f32.mxu0 0.0
        %367 = vmatmul.mubr.f32.gmra.mxu0 %v227
        %v368 = vpop.f32.mrf.mxu0
        %v369 = vadd.f32 0.0, %v368
        %v370 = vpop.f32.mrf.mxu0
        %371 = vmatprep.mubr.f32.mxu0 0.0
        %372 = vmatmul.mubr.f32.gmra.mxu0 %v228
        %v373 = vpop.f32.mrf.mxu0
        %v374 = vadd.f32 0.0, %v373
        %v375 = vpop.f32.mrf.mxu0
        %376 = vdwg.mxu0
        %v377 = vlaneseq
        %v378 = vshrl.u32 %v377, 7
        %v379 = vcombine.high %v230, %v230
        %v381 = vunpack.c.l.s4 1966171168
        %v382 = vunpack.c.0.s8 %v381
        %v383 = vlaneseq
        %v384 = vshrl.u32 %v383, 7
        %v385 = vsub.s32 %v382, %v384
        %v386 = vrot.slane %v230, %v385
        %v388 = vunpack.c.l.s4 1966171168
        %v389 = vunpack.c.0.s8 %v388
        %v390 = vlaneseq
        %v391 = vshrl.u32 %v390, 7
        %v392 = vsub.s32 %v389, %v391
        %v393 = vrot.slane %v379, %v392
        %v394 = vcombine.high %v386, %v386
        %v395 = vcombine.high %v393, %v393
        %v397 = vunpack.c.l.s4 1966171168
        %v398 = vunpack.c.0.s8 %v397
        %v399 = vlaneseq
        %v400 = vshrl.u32 %v399, 7
        %v401 = vsub.s32 %v398, %v400
        %v402 = vrot.slane %v386, %v401
        %v404 = vunpack.c.l.s4 1966171168
        %v405 = vunpack.c.0.s8 %v404
        %v406 = vlaneseq
        %v407 = vshrl.u32 %v406, 7
        %v408 = vsub.s32 %v405, %v407
        %v409 = vrot.slane %v393, %v408
        %v411 = vunpack.c.l.s4 1966171168
        %v412 = vunpack.c.0.s8 %v411
        %v413 = vlaneseq
        %v414 = vshrl.u32 %v413, 7
        %v415 = vsub.s32 %v412, %v414
        %v416 = vrot.slane %v394, %v415
        %v418 = vunpack.c.l.s4 1966171168
        %v419 = vunpack.c.0.s8 %v418
        %v420 = vlaneseq
        %v421 = vshrl.u32 %v420, 7
        %v422 = vsub.s32 %v419, %v421
        %v423 = vrot.slane %v395, %v422
        %v424 = vcombine.high %v402, %v402
        %v425 = vcombine.high %v409, %v409
        %v426 = vcombine.high %v416, %v416
        %v427 = vcombine.high %v423, %v423
        %v428 = vcombine.high %v231, %v231
        %v430 = vunpack.c.l.s4 1966171168
        %v431 = vunpack.c.0.s8 %v430
        %v432 = vlaneseq
        %v433 = vshrl.u32 %v432, 7
        %v434 = vsub.s32 %v431, %v433
        %v435 = vrot.slane %v231, %v434
        %v437 = vunpack.c.l.s4 1966171168
        %v438 = vunpack.c.0.s8 %v437
        %v439 = vlaneseq
        %v440 = vshrl.u32 %v439, 7
        %v441 = vsub.s32 %v438, %v440
        %v442 = vrot.slane %v428, %v441
        %v443 = vcombine.high %v435, %v435
        %v444 = vcombine.high %v442, %v442
        %v446 = vunpack.c.l.s4 1966171168
        %v447 = vunpack.c.0.s8 %v446
        %v448 = vlaneseq
        %v449 = vshrl.u32 %v448, 7
        %v450 = vsub.s32 %v447, %v449
        %v451 = vrot.slane %v435, %v450
        %v453 = vunpack.c.l.s4 1966171168
        %v454 = vunpack.c.0.s8 %v453
        %v455 = vlaneseq
        %v456 = vshrl.u32 %v455, 7
        %v457 = vsub.s32 %v454, %v456
        %v458 = vrot.slane %v442, %v457
        %v460 = vunpack.c.l.s4 1966171168
        %v461 = vunpack.c.0.s8 %v460
        %v462 = vlaneseq
        %v463 = vshrl.u32 %v462, 7
        %v464 = vsub.s32 %v461, %v463
        %v465 = vrot.slane %v443, %v464
        %v467 = vunpack.c.l.s4 1966171168
        %v468 = vunpack.c.0.s8 %v467
        %v469 = vlaneseq
        %v470 = vshrl.u32 %v469, 7
        %v471 = vsub.s32 %v468, %v470
        %v472 = vrot.slane %v444, %v471
        %v473 = vcombine.high %v451, %v451
        %v474 = vcombine.high %v458, %v458
        %v475 = vcombine.high %v465, %v465
        %v476 = vcombine.high %v472, %v472
        %v477 = vlaneseq
        %v478 = vshrl.u32 %v477, 7
        %v479 = vsub.s32 0, %v478
        %v480 = vrot.slane %v402, %v479
        %v481 = vlaneseq
        %v482 = vshrl.u32 %v481, 7
        %v483 = vsub.s32 0, %v482
        %v484 = vrot.slane %v416, %v483
        %v485 = vlaneseq
        %v486 = vshrl.u32 %v485, 7
        %v487 = vsub.s32 0, %v486
        %v488 = vrot.slane %v424, %v487
        %v489 = vlaneseq
        %v490 = vshrl.u32 %v489, 7
        %v491 = vsub.s32 0, %v490
        %v492 = vrot.slane %v426, %v491
        %v493 = vlaneseq
        %v494 = vshrl.u32 %v493, 7
        %v495 = vsub.s32 0, %v494
        %v496 = vrot.slane %v409, %v495
        %v497 = vlaneseq
        %v498 = vshrl.u32 %v497, 7
        %v499 = vsub.s32 0, %v498
        %v500 = vrot.slane %v423, %v499
        %v501 = vlaneseq
        %v502 = vshrl.u32 %v501, 7
        %v503 = vsub.s32 0, %v502
        %v504 = vrot.slane %v425, %v503
        %v505 = vlaneseq
        %v506 = vshrl.u32 %v505, 7
        %v507 = vsub.s32 0, %v506
        %v508 = vrot.slane %v427, %v507
        %v509 = vlaneseq
        %v510 = vshrl.u32 %v509, 7
        %v511 = vsub.s32 0, %v510
        %v512 = vrot.slane %v451, %v511
        %v513 = vlaneseq
        %v514 = vshrl.u32 %v513, 7
        %v515 = vsub.s32 0, %v514
        %v516 = vrot.slane %v465, %v515
        %v517 = vlaneseq
        %v518 = vshrl.u32 %v517, 7
        %v519 = vsub.s32 0, %v518
        %v520 = vrot.slane %v473, %v519
        %v521 = vlaneseq
        %v522 = vshrl.u32 %v521, 7
        %v523 = vsub.s32 0, %v522
        %v524 = vrot.slane %v475, %v523
        %v525 = vlaneseq
        %v526 = vshrl.u32 %v525, 7
        %v527 = vsub.s32 0, %v526
        %v528 = vrot.slane %v458, %v527
        %v529 = vlaneseq
        %v530 = vshrl.u32 %v529, 7
        %v531 = vsub.s32 0, %v530
        %v532 = vrot.slane %v472, %v531
        %v533 = vlaneseq
        %v534 = vshrl.u32 %v533, 7
        %v535 = vsub.s32 0, %v534
        %v536 = vrot.slane %v474, %v535
        %v537 = vlaneseq
        %v538 = vshrl.u32 %v537, 7
        %v539 = vsub.s32 0, %v538
        %v540 = vrot.slane %v476, %v539
        %vm541 = vcmp.lt.s32.totalorder %v378, %v480
        %vm542 = vcmp.lt.s32.totalorder %v378, %v484
        %vm543 = vcmp.lt.s32.totalorder %v378, %v488
        %vm544 = vcmp.lt.s32.totalorder %v378, %v492
        %vm545 = vcmp.lt.s32.totalorder %v378, %v496
        %vm546 = vcmp.lt.s32.totalorder %v378, %v500
        %vm547 = vcmp.lt.s32.totalorder %v378, %v504
        %vm548 = vcmp.lt.s32.totalorder %v378, %v508
        %vm549 = vcmp.lt.s32.totalorder %v378, %v512
        %vm550 = vcmp.lt.s32.totalorder %v378, %v516
        %vm551 = vcmp.lt.s32.totalorder %v378, %v520
        %vm552 = vcmp.lt.s32.totalorder %v378, %v524
        %vm553 = vcmp.lt.s32.totalorder %v378, %v528
        %vm554 = vcmp.lt.s32.totalorder %v378, %v532
        %vm555 = vcmp.lt.s32.totalorder %v378, %v536
        %vm556 = vcmp.lt.s32.totalorder %v378, %v540
        %v557 = vsel %vm541, 0.0, -inf
        %v558 = vsel %vm542, 0.0, -inf
        %v559 = vsel %vm543, 0.0, -inf
        %v560 = vsel %vm544, 0.0, -inf
        %v561 = vsel %vm545, 0.0, -inf
        %v562 = vsel %vm546, 0.0, -inf
        %v563 = vsel %vm547, 0.0, -inf
        %v564 = vsel %vm548, 0.0, -inf
        %v565 = vsel %vm549, 0.0, -inf
        %v566 = vsel %vm550, 0.0, -inf
        %v567 = vsel %vm551, 0.0, -inf
        %v568 = vsel %vm552, 0.0, -inf
        %v569 = vsel %vm553, 0.0, -inf
        %v570 = vsel %vm554, 0.0, -inf
        %v571 = vsel %vm555, 0.0, -inf
        %v572 = vsel %vm556, 0.0, -inf
        %574 = vset.pattern.permute.xlu0 0
        %575 = vperm.xlu0 %574, %v557
        %v576 = vpop.permute.xlu0 %575
        %579 = vset.pattern.permute.xlu0 0
        %580 = vperm.xlu0 %579, %v558
        %v581 = vpop.permute.xlu0 %580
        %584 = vset.pattern.permute.xlu0 0
        %585 = vperm.xlu0 %584, %v559
        %v586 = vpop.permute.xlu0 %585
        %589 = vset.pattern.permute.xlu0 0
        %590 = vperm.xlu0 %589, %v560
        %v591 = vpop.permute.xlu0 %590
        %594 = vset.pattern.permute.xlu0 0
        %595 = vperm.xlu0 %594, %v561
        %v596 = vpop.permute.xlu0 %595
        %599 = vset.pattern.permute.xlu0 0
        %600 = vperm.xlu0 %599, %v562
        %v601 = vpop.permute.xlu0 %600
        %604 = vset.pattern.permute.xlu0 0
        %605 = vperm.xlu0 %604, %v563
        %v606 = vpop.permute.xlu0 %605
        %609 = vset.pattern.permute.xlu0 0
        %610 = vperm.xlu0 %609, %v564
        %v611 = vpop.permute.xlu0 %610
        %614 = vset.pattern.permute.xlu0 0
        %615 = vperm.xlu0 %614, %v565
        %v616 = vpop.permute.xlu0 %615
        %619 = vset.pattern.permute.xlu0 0
        %620 = vperm.xlu0 %619, %v566
        %v621 = vpop.permute.xlu0 %620
        %624 = vset.pattern.permute.xlu0 0
        %625 = vperm.xlu0 %624, %v567
        %v626 = vpop.permute.xlu0 %625
        %629 = vset.pattern.permute.xlu0 0
        %630 = vperm.xlu0 %629, %v568
        %v631 = vpop.permute.xlu0 %630
        %634 = vset.pattern.permute.xlu0 0
        %635 = vperm.xlu0 %634, %v569
        %v636 = vpop.permute.xlu0 %635
        %639 = vset.pattern.permute.xlu0 0
        %640 = vperm.xlu0 %639, %v570
        %v641 = vpop.permute.xlu0 %640
        %644 = vset.pattern.permute.xlu0 0
        %645 = vperm.xlu0 %644, %v571
        %v646 = vpop.permute.xlu0 %645
        %649 = vset.pattern.permute.xlu0 0
        %650 = vperm.xlu0 %649, %v572
        %v651 = vpop.permute.xlu0 %650
        %v653 = vadd.f32 %v299, %v576
        %v654 = vadd.f32 %v304, %v581
        %v655 = vadd.f32 %v309, %v586
        %v656 = vadd.f32 %v314, %v591
        %v657 = vadd.f32 %v319, %v596
        %v658 = vadd.f32 %v324, %v601
        %v659 = vadd.f32 %v329, %v606
        %v660 = vadd.f32 %v334, %v611
        %v661 = vadd.f32 %v339, %v616
        %v662 = vadd.f32 %v344, %v621
        %v663 = vadd.f32 %v349, %v626
        %v664 = vadd.f32 %v354, %v631
        %v665 = vadd.f32 %v359, %v636
        %v666 = vadd.f32 %v364, %v641
        %v667 = vadd.f32 %v369, %v646
        %v668 = vadd.f32 %v374, %v651
        %vm669 = vcmask 64512
        %v670 = vsel %vm669, %v653, -inf
        %v671 = vrot.slane %v670, 4
        %v672 = vmax.f32 %v670, %v671
        %v673 = vrot.slane %v672, 2
        %v674 = vmax.f32 %v672, %v673
        %v675 = vrot.slane %v674, 1
        %v676 = vmax.f32 %v674, %v675
        %v677 = vsel %vm669, %v654, -inf
        %v678 = vrot.slane %v677, 4
        %v679 = vmax.f32 %v677, %v678
        %v680 = vrot.slane %v679, 2
        %v681 = vmax.f32 %v679, %v680
        %v682 = vrot.slane %v681, 1
        %v683 = vmax.f32 %v681, %v682
        %v684 = vsel %vm669, %v655, -inf
        %v685 = vrot.slane %v684, 4
        %v686 = vmax.f32 %v684, %v685
        %v687 = vrot.slane %v686, 2
        %v688 = vmax.f32 %v686, %v687
        %v689 = vrot.slane %v688, 1
        %v690 = vmax.f32 %v688, %v689
        %v691 = vsel %vm669, %v656, -inf
        %v692 = vrot.slane %v691, 4
        %v693 = vmax.f32 %v691, %v692
        %v694 = vrot.slane %v693, 2
        %v695 = vmax.f32 %v693, %v694
        %v696 = vrot.slane %v695, 1
        %v697 = vmax.f32 %v695, %v696
        %v698 = vsel %vm669, %v657, -inf
        %v699 = vrot.slane %v698, 4
        %v700 = vmax.f32 %v698, %v699
        %v701 = vrot.slane %v700, 2
        %v702 = vmax.f32 %v700, %v701
        %v703 = vrot.slane %v702, 1
        %v704 = vmax.f32 %v702, %v703
        %v705 = vsel %vm669, %v658, -inf
        %v706 = vrot.slane %v705, 4
        %v707 = vmax.f32 %v705, %v706
        %v708 = vrot.slane %v707, 2
        %v709 = vmax.f32 %v707, %v708
        %v710 = vrot.slane %v709, 1
        %v711 = vmax.f32 %v709, %v710
        %v712 = vsel %vm669, %v659, -inf
        %v713 = vrot.slane %v712, 4
        %v714 = vmax.f32 %v712, %v713
        %v715 = vrot.slane %v714, 2
        %v716 = vmax.f32 %v714, %v715
        %v717 = vrot.slane %v716, 1
        %v718 = vmax.f32 %v716, %v717
        %v719 = vsel %vm669, %v660, -inf
        %v720 = vrot.slane %v719, 4
        %v721 = vmax.f32 %v719, %v720
        %v722 = vrot.slane %v721, 2
        %v723 = vmax.f32 %v721, %v722
        %v724 = vrot.slane %v723, 1
        %v725 = vmax.f32 %v723, %v724
        %v726 = vsel %vm669, %v661, -inf
        %v727 = vrot.slane %v726, 4
        %v728 = vmax.f32 %v726, %v727
        %v729 = vrot.slane %v728, 2
        %v730 = vmax.f32 %v728, %v729
        %v731 = vrot.slane %v730, 1
        %v732 = vmax.f32 %v730, %v731
        %v733 = vsel %vm669, %v662, -inf
        %v734 = vrot.slane %v733, 4
        %v735 = vmax.f32 %v733, %v734
        %v736 = vrot.slane %v735, 2
        %v737 = vmax.f32 %v735, %v736
        %v738 = vrot.slane %v737, 1
        %v739 = vmax.f32 %v737, %v738
        %v740 = vsel %vm669, %v663, -inf
        %v741 = vrot.slane %v740, 4
        %v742 = vmax.f32 %v740, %v741
        %v743 = vrot.slane %v742, 2
        %v744 = vmax.f32 %v742, %v743
        %v745 = vrot.slane %v744, 1
        %v746 = vmax.f32 %v744, %v745
        %v747 = vsel %vm669, %v664, -inf
        %v748 = vrot.slane %v747, 4
        %v749 = vmax.f32 %v747, %v748
        %v750 = vrot.slane %v749, 2
        %v751 = vmax.f32 %v749, %v750
        %v752 = vrot.slane %v751, 1
        %v753 = vmax.f32 %v751, %v752
        %v754 = vsel %vm669, %v665, -inf
        %v755 = vrot.slane %v754, 4
        %v756 = vmax.f32 %v754, %v755
        %v757 = vrot.slane %v756, 2
        %v758 = vmax.f32 %v756, %v757
        %v759 = vrot.slane %v758, 1
        %v760 = vmax.f32 %v758, %v759
        %v761 = vsel %vm669, %v666, -inf
        %v762 = vrot.slane %v761, 4
        %v763 = vmax.f32 %v761, %v762
        %v764 = vrot.slane %v763, 2
        %v765 = vmax.f32 %v763, %v764
        %v766 = vrot.slane %v765, 1
        %v767 = vmax.f32 %v765, %v766
        %v768 = vsel %vm669, %v667, -inf
        %v769 = vrot.slane %v768, 4
        %v770 = vmax.f32 %v768, %v769
        %v771 = vrot.slane %v770, 2
        %v772 = vmax.f32 %v770, %v771
        %v773 = vrot.slane %v772, 1
        %v774 = vmax.f32 %v772, %v773
        %v775 = vsel %vm669, %v668, -inf
        %v776 = vrot.slane %v775, 4
        %v777 = vmax.f32 %v775, %v776
        %v778 = vrot.slane %v777, 2
        %v779 = vmax.f32 %v777, %v778
        %v780 = vrot.slane %v779, 1
        %v781 = vmax.f32 %v779, %v780
        %v782 = vsub.f32 %v653, %v676
        %v783 = vsub.f32 %v654, %v683
        %v784 = vsub.f32 %v655, %v690
        %v785 = vsub.f32 %v656, %v697
        %v786 = vsub.f32 %v657, %v704
        %v787 = vsub.f32 %v658, %v711
        %v788 = vsub.f32 %v659, %v718
        %v789 = vsub.f32 %v660, %v725
        %v790 = vsub.f32 %v661, %v732
        %v791 = vsub.f32 %v662, %v739
        %v792 = vsub.f32 %v663, %v746
        %v793 = vsub.f32 %v664, %v753
        %v794 = vsub.f32 %v665, %v760
        %v795 = vsub.f32 %v666, %v767
        %v796 = vsub.f32 %v667, %v774
        %v797 = vsub.f32 %v668, %v781
        %v798 = vmul.f32 %v782, 1.442695
        %v799 = vpow.pop %v798
        %v800 = vmul.f32 %v783, 1.442695
        %v801 = vpow.pop %v800
        %v802 = vmul.f32 %v784, 1.442695
        %v803 = vpow.pop %v802
        %v804 = vmul.f32 %v785, 1.442695
        %v805 = vpow.pop %v804
        %v806 = vmul.f32 %v786, 1.442695
        %v807 = vpow.pop %v806
        %v808 = vmul.f32 %v787, 1.442695
        %v809 = vpow.pop %v808
        %v810 = vmul.f32 %v788, 1.442695
        %v811 = vpow.pop %v810
        %v812 = vmul.f32 %v789, 1.442695
        %v813 = vpow.pop %v812
        %v814 = vmul.f32 %v790, 1.442695
        %v815 = vpow.pop %v814
        %v816 = vmul.f32 %v791, 1.442695
        %v817 = vpow.pop %v816
        %v818 = vmul.f32 %v792, 1.442695
        %v819 = vpow.pop %v818
        %v820 = vmul.f32 %v793, 1.442695
        %v821 = vpow.pop %v820
        %v822 = vmul.f32 %v794, 1.442695
        %v823 = vpow.pop %v822
        %v824 = vmul.f32 %v795, 1.442695
        %v825 = vpow.pop %v824
        %v826 = vmul.f32 %v796, 1.442695
        %v827 = vpow.pop %v826
        %v828 = vmul.f32 %v797, 1.442695
        %v829 = vpow.pop %v828
        %v830 = vsel %vm669, %v799, 0.0
        %v831 = vrot.slane %v830, 4
        %v832 = vadd.f32 %v830, %v831
        %v833 = vrot.slane %v832, 2
        %v834 = vadd.f32 %v832, %v833
        %v835 = vrot.slane %v834, 1
        %v836 = vadd.f32 %v834, %v835
        %v837 = vsel %vm669, %v801, 0.0
        %v838 = vrot.slane %v837, 4
        %v839 = vadd.f32 %v837, %v838
        %v840 = vrot.slane %v839, 2
        %v841 = vadd.f32 %v839, %v840
        %v842 = vrot.slane %v841, 1
        %v843 = vadd.f32 %v841, %v842
        %v844 = vsel %vm669, %v803, 0.0
        %v845 = vrot.slane %v844, 4
        %v846 = vadd.f32 %v844, %v845
        %v847 = vrot.slane %v846, 2
        %v848 = vadd.f32 %v846, %v847
        %v849 = vrot.slane %v848, 1
        %v850 = vadd.f32 %v848, %v849
        %v851 = vsel %vm669, %v805, 0.0
        %v852 = vrot.slane %v851, 4
        %v853 = vadd.f32 %v851, %v852
        %v854 = vrot.slane %v853, 2
        %v855 = vadd.f32 %v853, %v854
        %v856 = vrot.slane %v855, 1
        %v857 = vadd.f32 %v855, %v856
        %v858 = vsel %vm669, %v807, 0.0
        %v859 = vrot.slane %v858, 4
        %v860 = vadd.f32 %v858, %v859
        %v861 = vrot.slane %v860, 2
        %v862 = vadd.f32 %v860, %v861
        %v863 = vrot.slane %v862, 1
        %v864 = vadd.f32 %v862, %v863
        %v865 = vsel %vm669, %v809, 0.0
        %v866 = vrot.slane %v865, 4
        %v867 = vadd.f32 %v865, %v866
        %v868 = vrot.slane %v867, 2
        %v869 = vadd.f32 %v867, %v868
        %v870 = vrot.slane %v869, 1
        %v871 = vadd.f32 %v869, %v870
        %v872 = vsel %vm669, %v811, 0.0
        %v873 = vrot.slane %v872, 4
        %v874 = vadd.f32 %v872, %v873
        %v875 = vrot.slane %v874, 2
        %v876 = vadd.f32 %v874, %v875
        %v877 = vrot.slane %v876, 1
        %v878 = vadd.f32 %v876, %v877
        %v879 = vsel %vm669, %v813, 0.0
        %v880 = vrot.slane %v879, 4
        %v881 = vadd.f32 %v879, %v880
        %v882 = vrot.slane %v881, 2
        %v883 = vadd.f32 %v881, %v882
        %v884 = vrot.slane %v883, 1
        %v885 = vadd.f32 %v883, %v884
        %v886 = vsel %vm669, %v815, 0.0
        %v887 = vrot.slane %v886, 4
        %v888 = vadd.f32 %v886, %v887
        %v889 = vrot.slane %v888, 2
        %v890 = vadd.f32 %v888, %v889
        %v891 = vrot.slane %v890, 1
        %v892 = vadd.f32 %v890, %v891
        %v893 = vsel %vm669, %v817, 0.0
        %v894 = vrot.slane %v893, 4
        %v895 = vadd.f32 %v893, %v894
        %v896 = vrot.slane %v895, 2
        %v897 = vadd.f32 %v895, %v896
        %v898 = vrot.slane %v897, 1
        %v899 = vadd.f32 %v897, %v898
        %v900 = vsel %vm669, %v819, 0.0
        %v901 = vrot.slane %v900, 4
        %v902 = vadd.f32 %v900, %v901
        %v903 = vrot.slane %v902, 2
        %v904 = vadd.f32 %v902, %v903
        %v905 = vrot.slane %v904, 1
        %v906 = vadd.f32 %v904, %v905
        %v907 = vsel %vm669, %v821, 0.0
        %v908 = vrot.slane %v907, 4
        %v909 = vadd.f32 %v907, %v908
        %v910 = vrot.slane %v909, 2
        %v911 = vadd.f32 %v909, %v910
        %v912 = vrot.slane %v911, 1
        %v913 = vadd.f32 %v911, %v912
        %v914 = vsel %vm669, %v823, 0.0
        %v915 = vrot.slane %v914, 4
        %v916 = vadd.f32 %v914, %v915
        %v917 = vrot.slane %v916, 2
        %v918 = vadd.f32 %v916, %v917
        %v919 = vrot.slane %v918, 1
        %v920 = vadd.f32 %v918, %v919
        %v921 = vsel %vm669, %v825, 0.0
        %v922 = vrot.slane %v921, 4
        %v923 = vadd.f32 %v921, %v922
        %v924 = vrot.slane %v923, 2
        %v925 = vadd.f32 %v923, %v924
        %v926 = vrot.slane %v925, 1
        %v927 = vadd.f32 %v925, %v926
        %v928 = vsel %vm669, %v827, 0.0
        %v929 = vrot.slane %v928, 4
        %v930 = vadd.f32 %v928, %v929
        %v931 = vrot.slane %v930, 2
        %v932 = vadd.f32 %v930, %v931
        %v933 = vrot.slane %v932, 1
        %v934 = vadd.f32 %v932, %v933
        %v935 = vsel %vm669, %v829, 0.0
        %v936 = vrot.slane %v935, 4
        %v937 = vadd.f32 %v935, %v936
        %v938 = vrot.slane %v937, 2
        %v939 = vadd.f32 %v937, %v938
        %v940 = vrot.slane %v939, 1
        %v941 = vadd.f32 %v939, %v940
        %v942 = vrcp.pop %v836
        %v943 = vrcp.pop %v843
        %v944 = vrcp.pop %v850
        %v945 = vrcp.pop %v857
        %v946 = vrcp.pop %v864
        %v947 = vrcp.pop %v871
        %v948 = vrcp.pop %v878
        %v949 = vrcp.pop %v885
        %v950 = vrcp.pop %v892
        %v951 = vrcp.pop %v899
        %v952 = vrcp.pop %v906
        %v953 = vrcp.pop %v913
        %v954 = vrcp.pop %v920
        %v955 = vrcp.pop %v927
        %v956 = vrcp.pop %v934
        %v957 = vrcp.pop %v941
        %v958 = vmul.f32 %v799, %v942
        %v959 = vmul.f32 %v801, %v943
        %v960 = vmul.f32 %v803, %v944
        %v961 = vmul.f32 %v805, %v945
        %v962 = vmul.f32 %v807, %v946
        %v963 = vmul.f32 %v809, %v947
        %v964 = vmul.f32 %v811, %v948
        %v965 = vmul.f32 %v813, %v949
        %v966 = vmul.f32 %v815, %v950
        %v967 = vmul.f32 %v817, %v951
        %v968 = vmul.f32 %v819, %v952
        %v969 = vmul.f32 %v821, %v953
        %v970 = vmul.f32 %v823, %v954
        %v971 = vmul.f32 %v825, %v955
        %v972 = vmul.f32 %v827, %v956
        %v973 = vmul.f32 %v829, %v957
        %974 = vxpose.xlu0.b32.start [1/16] %v958, 128
        %975 = vxpose.xlu0.b32.cont [2/16] 0.0, 128
        %976 = vxpose.xlu0.b32.cont [3/16] 0.0, 128
        %977 = vxpose.xlu0.b32.cont [4/16] 0.0, 128
        %978 = vxpose.xlu0.b32.cont [5/16] 0.0, 128
        %979 = vxpose.xlu0.b32.cont [6/16] 0.0, 128
        %980 = vxpose.xlu0.b32.cont [7/16] 0.0, 128
        %981 = vxpose.xlu0.b32.cont [8/16] 0.0, 128
        %982 = vxpose.xlu0.b32.cont [9/16] 0.0, 128
        %983 = vxpose.xlu0.b32.cont [10/16] 0.0, 128
        %984 = vxpose.xlu0.b32.cont [11/16] 0.0, 128
        %985 = vxpose.xlu0.b32.cont [12/16] 0.0, 128
        %986 = vxpose.xlu0.b32.cont [13/16] 0.0, 128
        %987 = vxpose.xlu0.b32.cont [14/16] 0.0, 128
        %988 = vxpose.xlu0.b32.cont [15/16] 0.0, 128
        %989 = vxpose.xlu0.b32.end [16/16] 0.0, 128
        %v990 = vpop.trf.xlu0
        %v991 = vpop.trf.xlu0
        %v992 = vpop.trf.xlu0
        %v993 = vpop.trf.xlu0
        %v994 = vpop.trf.xlu0
        %v995 = vpop.trf.xlu0
        %v996 = vpop.trf.xlu0
        %v997 = vpop.trf.xlu0
        %v998 = vpop.trf.xlu0
        %v999 = vpop.trf.xlu0
        %v1000 = vpop.trf.xlu0
        %v1001 = vpop.trf.xlu0
        %v1002 = vpop.trf.xlu0
        %v1003 = vpop.trf.xlu0
        %v1004 = vpop.trf.xlu0
        %v1005 = vpop.trf.xlu0
        %v1007 = vsel %vm669, %v990, 0
        %1009 = vmatprep.subr.mxu0 0.0
        %1010 = vmatpush1.msra.mxu0 0.0
        %1011 = vmatprep.subr.mxu0 0.0
        %1012 = vmatpush1.msra.mxu0 0.0
        %1013 = vmatprep.subr.mxu0 0.0
        %1014 = vmatpush1.msra.mxu0 0.0
        %1015 = vmatprep.subr.mxu0 0.0
        %1016 = vmatpush1.msra.mxu0 0.0
        %1017 = vmatprep.subr.mxu0 0.0
        %1018 = vmatpush1.msra.mxu0 0.0
        %1019 = vmatprep.subr.mxu0 0.0
        %1020 = vmatpush1.msra.mxu0 0.0
        %1021 = vmatprep.subr.mxu0 0.0
        %1022 = vmatpush1.msra.mxu0 0.0
        %1023 = vmatprep.subr.mxu0 0.0
        %1024 = vmatpush1.msra.mxu0 0.0
        %1025 = vmatprep.subr.mxu0 0.0
        %1026 = vmatpush1.msra.mxu0 0.0
        %1027 = vmatprep.subr.mxu0 0.0
        %1028 = vmatpush1.msra.mxu0 0.0
        %1029 = vmatprep.subr.mxu0 0.0
        %1030 = vmatpush1.msra.mxu0 0.0
        %1031 = vmatprep.subr.mxu0 0.0
        %1032 = vmatpush1.msra.mxu0 0.0
        %1033 = vmatprep.subr.mxu0 0.0
        %1034 = vmatpush1.msra.mxu0 0.0
        %1035 = vmatprep.subr.mxu0 0.0
        %1036 = vmatpush1.msra.mxu0 0.0
        %1037 = vmatprep.subr.mxu0 0.0
        %1038 = vmatpush1.msra.mxu0 0.0
        %1039 = vmatprep.subr.mxu0 0.0
        %1040 = vmatpush1.msra.mxu0 %v213
        %1041 = vmatprep.subr.mxu0 0.0
        %1042 = vmatpush2.msra.mxu0 0.0
        %1043 = vmatprep.subr.mxu0 0.0
        %1044 = vmatpush2.msra.mxu0 0.0
        %1045 = vmatprep.subr.mxu0 0.0
        %1046 = vmatpush2.msra.mxu0 0.0
        %1047 = vmatprep.subr.mxu0 0.0
        %1048 = vmatpush2.msra.mxu0 0.0
        %1049 = vmatprep.subr.mxu0 0.0
        %1050 = vmatpush2.msra.mxu0 0.0
        %1051 = vmatprep.subr.mxu0 0.0
        %1052 = vmatpush2.msra.mxu0 0.0
        %1053 = vmatprep.subr.mxu0 0.0
        %1054 = vmatpush2.msra.mxu0 0.0
        %1055 = vmatprep.subr.mxu0 0.0
        %1056 = vmatpush2.msra.mxu0 0.0
        %1057 = vmatprep.subr.mxu0 0.0
        %1058 = vmatpush2.msra.mxu0 0.0
        %1059 = vmatprep.subr.mxu0 0.0
        %1060 = vmatpush2.msra.mxu0 0.0
        %1061 = vmatprep.subr.mxu0 0.0
        %1062 = vmatpush2.msra.mxu0 0.0
        %1063 = vmatprep.subr.mxu0 0.0
        %1064 = vmatpush2.msra.mxu0 0.0
        %1065 = vmatprep.subr.mxu0 0.0
        %1066 = vmatpush2.msra.mxu0 0.0
        %1067 = vmatprep.subr.mxu0 0.0
        %1068 = vmatpush2.msra.mxu0 0.0
        %1069 = vmatprep.subr.mxu0 0.0
        %1070 = vmatpush2.msra.mxu0 0.0
        %1071 = vmatprep.subr.mxu0 0.0
        %1072 = vmatpush2.msra.mxu0 0.0
        %1073 = vmatprep.mubr.f32.mxu0 0.0
        %1074 = vmatmul.mubr.f32.gmra.mxu0 %v1007
        %v1075 = vpop.f32.mrf.mxu0
        %v1076 = vadd.f32 0.0, %v1075
        %v1077 = vpop.f32.mrf.mxu0
        %1078 = vdwg.mxu0
        %1079 = vxpose.xlu0.b32.start [1/16] %v959, 128
        %1080 = vxpose.xlu0.b32.cont [2/16] 0.0, 128
        %1081 = vxpose.xlu0.b32.cont [3/16] 0.0, 128
        %1082 = vxpose.xlu0.b32.cont [4/16] 0.0, 128
        %1083 = vxpose.xlu0.b32.cont [5/16] 0.0, 128
        %1084 = vxpose.xlu0.b32.cont [6/16] 0.0, 128
        %1085 = vxpose.xlu0.b32.cont [7/16] 0.0, 128
        %1086 = vxpose.xlu0.b32.cont [8/16] 0.0, 128
        %1087 = vxpose.xlu0.b32.cont [9/16] 0.0, 128
        %1088 = vxpose.xlu0.b32.cont [10/16] 0.0, 128
        %1089 = vxpose.xlu0.b32.cont [11/16] 0.0, 128
        %1090 = vxpose.xlu0.b32.cont [12/16] 0.0, 128
        %1091 = vxpose.xlu0.b32.cont [13/16] 0.0, 128
        %1092 = vxpose.xlu0.b32.cont [14/16] 0.0, 128
        %1093 = vxpose.xlu0.b32.cont [15/16] 0.0, 128
        %1094 = vxpose.xlu0.b32.end [16/16] 0.0, 128
        %v1095 = vpop.trf.xlu0
        %v1096 = vpop.trf.xlu0
        %v1097 = vpop.trf.xlu0
        %v1098 = vpop.trf.xlu0
        %v1099 = vpop.trf.xlu0
        %v1100 = vpop.trf.xlu0
        %v1101 = vpop.trf.xlu0
        %v1102 = vpop.trf.xlu0
        %v1103 = vpop.trf.xlu0
        %v1104 = vpop.trf.xlu0
        %v1105 = vpop.trf.xlu0
        %v1106 = vpop.trf.xlu0
        %v1107 = vpop.trf.xlu0
        %v1108 = vpop.trf.xlu0
        %v1109 = vpop.trf.xlu0
        %v1110 = vpop.trf.xlu0
        %v1112 = vsel %vm669, %v1095, 0
        %1114 = vmatprep.subr.mxu0 0.0
        %1115 = vmatpush1.msra.mxu0 0.0
        %1116 = vmatprep.subr.mxu0 0.0
        %1117 = vmatpush1.msra.mxu0 0.0
        %1118 = vmatprep.subr.mxu0 0.0
        %1119 = vmatpush1.msra.mxu0 0.0
        %1120 = vmatprep.subr.mxu0 0.0
        %1121 = vmatpush1.msra.mxu0 0.0
        %1122 = vmatprep.subr.mxu0 0.0
        %1123 = vmatpush1.msra.mxu0 0.0
        %1124 = vmatprep.subr.mxu0 0.0
        %1125 = vmatpush1.msra.mxu0 0.0
        %1126 = vmatprep.subr.mxu0 0.0
        %1127 = vmatpush1.msra.mxu0 0.0
        %1128 = vmatprep.subr.mxu0 0.0
        %1129 = vmatpush1.msra.mxu0 0.0
        %1130 = vmatprep.subr.mxu0 0.0
        %1131 = vmatpush1.msra.mxu0 0.0
        %1132 = vmatprep.subr.mxu0 0.0
        %1133 = vmatpush1.msra.mxu0 0.0
        %1134 = vmatprep.subr.mxu0 0.0
        %1135 = vmatpush1.msra.mxu0 0.0
        %1136 = vmatprep.subr.mxu0 0.0
        %1137 = vmatpush1.msra.mxu0 0.0
        %1138 = vmatprep.subr.mxu0 0.0
        %1139 = vmatpush1.msra.mxu0 0.0
        %1140 = vmatprep.subr.mxu0 0.0
        %1141 = vmatpush1.msra.mxu0 0.0
        %1142 = vmatprep.subr.mxu0 0.0
        %1143 = vmatpush1.msra.mxu0 0.0
        %1144 = vmatprep.subr.mxu0 0.0
        %1145 = vmatpush1.msra.mxu0 %v214
        %1146 = vmatprep.subr.mxu0 0.0
        %1147 = vmatpush2.msra.mxu0 0.0
        %1148 = vmatprep.subr.mxu0 0.0
        %1149 = vmatpush2.msra.mxu0 0.0
        %1150 = vmatprep.subr.mxu0 0.0
        %1151 = vmatpush2.msra.mxu0 0.0
        %1152 = vmatprep.subr.mxu0 0.0
        %1153 = vmatpush2.msra.mxu0 0.0
        %1154 = vmatprep.subr.mxu0 0.0
        %1155 = vmatpush2.msra.mxu0 0.0
        %1156 = vmatprep.subr.mxu0 0.0
        %1157 = vmatpush2.msra.mxu0 0.0
        %1158 = vmatprep.subr.mxu0 0.0
        %1159 = vmatpush2.msra.mxu0 0.0
        %1160 = vmatprep.subr.mxu0 0.0
        %1161 = vmatpush2.msra.mxu0 0.0
        %1162 = vmatprep.subr.mxu0 0.0
        %1163 = vmatpush2.msra.mxu0 0.0
        %1164 = vmatprep.subr.mxu0 0.0
        %1165 = vmatpush2.msra.mxu0 0.0
        %1166 = vmatprep.subr.mxu0 0.0
        %1167 = vmatpush2.msra.mxu0 0.0
        %1168 = vmatprep.subr.mxu0 0.0
        %1169 = vmatpush2.msra.mxu0 0.0
        %1170 = vmatprep.subr.mxu0 0.0
        %1171 = vmatpush2.msra.mxu0 0.0
        %1172 = vmatprep.subr.mxu0 0.0
        %1173 = vmatpush2.msra.mxu0 0.0
        %1174 = vmatprep.subr.mxu0 0.0
        %1175 = vmatpush2.msra.mxu0 0.0
        %1176 = vmatprep.subr.mxu0 0.0
        %1177 = vmatpush2.msra.mxu0 0.0
        %1178 = vmatprep.mubr.f32.mxu0 0.0
        %1179 = vmatmul.mubr.f32.gmra.mxu0 %v1112
        %v1180 = vpop.f32.mrf.mxu0
        %v1181 = vadd.f32 0.0, %v1180
        %v1182 = vpop.f32.mrf.mxu0
        %1183 = vdwg.mxu0
        %1184 = vxpose.xlu0.b32.start [1/16] %v960, 128
        %1185 = vxpose.xlu0.b32.cont [2/16] 0.0, 128
        %1186 = vxpose.xlu0.b32.cont [3/16] 0.0, 128
        %1187 = vxpose.xlu0.b32.cont [4/16] 0.0, 128
        %1188 = vxpose.xlu0.b32.cont [5/16] 0.0, 128
        %1189 = vxpose.xlu0.b32.cont [6/16] 0.0, 128
        %1190 = vxpose.xlu0.b32.cont [7/16] 0.0, 128
        %1191 = vxpose.xlu0.b32.cont [8/16] 0.0, 128
        %1192 = vxpose.xlu0.b32.cont [9/16] 0.0, 128
        %1193 = vxpose.xlu0.b32.cont [10/16] 0.0, 128
        %1194 = vxpose.xlu0.b32.cont [11/16] 0.0, 128
        %1195 = vxpose.xlu0.b32.cont [12/16] 0.0, 128
        %1196 = vxpose.xlu0.b32.cont [13/16] 0.0, 128
        %1197 = vxpose.xlu0.b32.cont [14/16] 0.0, 128
        %1198 = vxpose.xlu0.b32.cont [15/16] 0.0, 128
        %1199 = vxpose.xlu0.b32.end [16/16] 0.0, 128
        %v1200 = vpop.trf.xlu0
        %v1201 = vpop.trf.xlu0
        %v1202 = vpop.trf.xlu0
        %v1203 = vpop.trf.xlu0
        %v1204 = vpop.trf.xlu0
        %v1205 = vpop.trf.xlu0
        %v1206 = vpop.trf.xlu0
        %v1207 = vpop.trf.xlu0
        %v1208 = vpop.trf.xlu0
        %v1209 = vpop.trf.xlu0
        %v1210 = vpop.trf.xlu0
        %v1211 = vpop.trf.xlu0
        %v1212 = vpop.trf.xlu0
        %v1213 = vpop.trf.xlu0
        %v1214 = vpop.trf.xlu0
        %v1215 = vpop.trf.xlu0
        %v1217 = vsel %vm669, %v1200, 0
        %1219 = vmatprep.subr.mxu0 0.0
        %1220 = vmatpush1.msra.mxu0 0.0
        %1221 = vmatprep.subr.mxu0 0.0
        %1222 = vmatpush1.msra.mxu0 0.0
        %1223 = vmatprep.subr.mxu0 0.0
        %1224 = vmatpush1.msra.mxu0 0.0
        %1225 = vmatprep.subr.mxu0 0.0
        %1226 = vmatpush1.msra.mxu0 0.0
        %1227 = vmatprep.subr.mxu0 0.0
        %1228 = vmatpush1.msra.mxu0 0.0
        %1229 = vmatprep.subr.mxu0 0.0
        %1230 = vmatpush1.msra.mxu0 0.0
        %1231 = vmatprep.subr.mxu0 0.0
        %1232 = vmatpush1.msra.mxu0 0.0
        %1233 = vmatprep.subr.mxu0 0.0
        %1234 = vmatpush1.msra.mxu0 0.0
        %1235 = vmatprep.subr.mxu0 0.0
        %1236 = vmatpush1.msra.mxu0 0.0
        %1237 = vmatprep.subr.mxu0 0.0
        %1238 = vmatpush1.msra.mxu0 0.0
        %1239 = vmatprep.subr.mxu0 0.0
        %1240 = vmatpush1.msra.mxu0 0.0
        %1241 = vmatprep.subr.mxu0 0.0
        %1242 = vmatpush1.msra.mxu0 0.0
        %1243 = vmatprep.subr.mxu0 0.0
        %1244 = vmatpush1.msra.mxu0 0.0
        %1245 = vmatprep.subr.mxu0 0.0
        %1246 = vmatpush1.msra.mxu0 0.0
        %1247 = vmatprep.subr.mxu0 0.0
        %1248 = vmatpush1.msra.mxu0 0.0
        %1249 = vmatprep.subr.mxu0 0.0
        %1250 = vmatpush1.msra.mxu0 %v215
        %1251 = vmatprep.subr.mxu0 0.0
        %1252 = vmatpush2.msra.mxu0 0.0
        %1253 = vmatprep.subr.mxu0 0.0
        %1254 = vmatpush2.msra.mxu0 0.0
        %1255 = vmatprep.subr.mxu0 0.0
        %1256 = vmatpush2.msra.mxu0 0.0
        %1257 = vmatprep.subr.mxu0 0.0
        %1258 = vmatpush2.msra.mxu0 0.0
        %1259 = vmatprep.subr.mxu0 0.0
        %1260 = vmatpush2.msra.mxu0 0.0
        %1261 = vmatprep.subr.mxu0 0.0
        %1262 = vmatpush2.msra.mxu0 0.0
        %1263 = vmatprep.subr.mxu0 0.0
        %1264 = vmatpush2.msra.mxu0 0.0
        %1265 = vmatprep.subr.mxu0 0.0
        %1266 = vmatpush2.msra.mxu0 0.0
        %1267 = vmatprep.subr.mxu0 0.0
        %1268 = vmatpush2.msra.mxu0 0.0
        %1269 = vmatprep.subr.mxu0 0.0
        %1270 = vmatpush2.msra.mxu0 0.0
        %1271 = vmatprep.subr.mxu0 0.0
        %1272 = vmatpush2.msra.mxu0 0.0
        %1273 = vmatprep.subr.mxu0 0.0
        %1274 = vmatpush2.msra.mxu0 0.0
        %1275 = vmatprep.subr.mxu0 0.0
        %1276 = vmatpush2.msra.mxu0 0.0
        %1277 = vmatprep.subr.mxu0 0.0
        %1278 = vmatpush2.msra.mxu0 0.0
        %1279 = vmatprep.subr.mxu0 0.0
        %1280 = vmatpush2.msra.mxu0 0.0
        %1281 = vmatprep.subr.mxu0 0.0
        %1282 = vmatpush2.msra.mxu0 0.0
        %1283 = vmatprep.mubr.f32.mxu0 0.0
        %1284 = vmatmul.mubr.f32.gmra.mxu0 %v1217
        %v1285 = vpop.f32.mrf.mxu0
        %v1286 = vadd.f32 0.0, %v1285
        %v1287 = vpop.f32.mrf.mxu0
        %1288 = vdwg.mxu0
        %1289 = vxpose.xlu0.b32.start [1/16] %v961, 128
        %1290 = vxpose.xlu0.b32.cont [2/16] 0.0, 128
        %1291 = vxpose.xlu0.b32.cont [3/16] 0.0, 128
        %1292 = vxpose.xlu0.b32.cont [4/16] 0.0, 128
        %1293 = vxpose.xlu0.b32.cont [5/16] 0.0, 128
        %1294 = vxpose.xlu0.b32.cont [6/16] 0.0, 128
        %1295 = vxpose.xlu0.b32.cont [7/16] 0.0, 128
        %1296 = vxpose.xlu0.b32.cont [8/16] 0.0, 128
        %1297 = vxpose.xlu0.b32.cont [9/16] 0.0, 128
        %1298 = vxpose.xlu0.b32.cont [10/16] 0.0, 128
        %1299 = vxpose.xlu0.b32.cont [11/16] 0.0, 128
        %1300 = vxpose.xlu0.b32.cont [12/16] 0.0, 128
        %1301 = vxpose.xlu0.b32.cont [13/16] 0.0, 128
        %1302 = vxpose.xlu0.b32.cont [14/16] 0.0, 128
        %1303 = vxpose.xlu0.b32.cont [15/16] 0.0, 128
        %1304 = vxpose.xlu0.b32.end [16/16] 0.0, 128
        %v1305 = vpop.trf.xlu0
        %v1306 = vpop.trf.xlu0
        %v1307 = vpop.trf.xlu0
        %v1308 = vpop.trf.xlu0
        %v1309 = vpop.trf.xlu0
        %v1310 = vpop.trf.xlu0
        %v1311 = vpop.trf.xlu0
        %v1312 = vpop.trf.xlu0
        %v1313 = vpop.trf.xlu0
        %v1314 = vpop.trf.xlu0
        %v1315 = vpop.trf.xlu0
        %v1316 = vpop.trf.xlu0
        %v1317 = vpop.trf.xlu0
        %v1318 = vpop.trf.xlu0
        %v1319 = vpop.trf.xlu0
        %v1320 = vpop.trf.xlu0
        %v1322 = vsel %vm669, %v1305, 0
        %1324 = vmatprep.subr.mxu0 0.0
        %1325 = vmatpush1.msra.mxu0 0.0
        %1326 = vmatprep.subr.mxu0 0.0
        %1327 = vmatpush1.msra.mxu0 0.0
        %1328 = vmatprep.subr.mxu0 0.0
        %1329 = vmatpush1.msra.mxu0 0.0
        %1330 = vmatprep.subr.mxu0 0.0
        %1331 = vmatpush1.msra.mxu0 0.0
        %1332 = vmatprep.subr.mxu0 0.0
        %1333 = vmatpush1.msra.mxu0 0.0
        %1334 = vmatprep.subr.mxu0 0.0
        %1335 = vmatpush1.msra.mxu0 0.0
        %1336 = vmatprep.subr.mxu0 0.0
        %1337 = vmatpush1.msra.mxu0 0.0
        %1338 = vmatprep.subr.mxu0 0.0
        %1339 = vmatpush1.msra.mxu0 0.0
        %1340 = vmatprep.subr.mxu0 0.0
        %1341 = vmatpush1.msra.mxu0 0.0
        %1342 = vmatprep.subr.mxu0 0.0
        %1343 = vmatpush1.msra.mxu0 0.0
        %1344 = vmatprep.subr.mxu0 0.0
        %1345 = vmatpush1.msra.mxu0 0.0
        %1346 = vmatprep.subr.mxu0 0.0
        %1347 = vmatpush1.msra.mxu0 0.0
        %1348 = vmatprep.subr.mxu0 0.0
        %1349 = vmatpush1.msra.mxu0 0.0
        %1350 = vmatprep.subr.mxu0 0.0
        %1351 = vmatpush1.msra.mxu0 0.0
        %1352 = vmatprep.subr.mxu0 0.0
        %1353 = vmatpush1.msra.mxu0 0.0
        %1354 = vmatprep.subr.mxu0 0.0
        %1355 = vmatpush1.msra.mxu0 %v216
        %1356 = vmatprep.subr.mxu0 0.0
        %1357 = vmatpush2.msra.mxu0 0.0
        %1358 = vmatprep.subr.mxu0 0.0
        %1359 = vmatpush2.msra.mxu0 0.0
        %1360 = vmatprep.subr.mxu0 0.0
        %1361 = vmatpush2.msra.mxu0 0.0
        %1362 = vmatprep.subr.mxu0 0.0
        %1363 = vmatpush2.msra.mxu0 0.0
        %1364 = vmatprep.subr.mxu0 0.0
        %1365 = vmatpush2.msra.mxu0 0.0
        %1366 = vmatprep.subr.mxu0 0.0
        %1367 = vmatpush2.msra.mxu0 0.0
        %1368 = vmatprep.subr.mxu0 0.0
        %1369 = vmatpush2.msra.mxu0 0.0
        %1370 = vmatprep.subr.mxu0 0.0
        %1371 = vmatpush2.msra.mxu0 0.0
        %1372 = vmatprep.subr.mxu0 0.0
        %1373 = vmatpush2.msra.mxu0 0.0
        %1374 = vmatprep.subr.mxu0 0.0
        %1375 = vmatpush2.msra.mxu0 0.0
        %1376 = vmatprep.subr.mxu0 0.0
        %1377 = vmatpush2.msra.mxu0 0.0
        %1378 = vmatprep.subr.mxu0 0.0
        %1379 = vmatpush2.msra.mxu0 0.0
        %1380 = vmatprep.subr.mxu0 0.0
        %1381 = vmatpush2.msra.mxu0 0.0
        %1382 = vmatprep.subr.mxu0 0.0
        %1383 = vmatpush2.msra.mxu0 0.0
        %1384 = vmatprep.subr.mxu0 0.0
        %1385 = vmatpush2.msra.mxu0 0.0
        %1386 = vmatprep.subr.mxu0 0.0
        %1387 = vmatpush2.msra.mxu0 0.0
        %1388 = vmatprep.mubr.f32.mxu0 0.0
        %1389 = vmatmul.mubr.f32.gmra.mxu0 %v1322
        %v1390 = vpop.f32.mrf.mxu0
        %v1391 = vadd.f32 0.0, %v1390
        %v1392 = vpop.f32.mrf.mxu0
        %1393 = vdwg.mxu0
        %1394 = vxpose.xlu0.b32.start [1/16] %v962, 128
        %1395 = vxpose.xlu0.b32.cont [2/16] 0.0, 128
        %1396 = vxpose.xlu0.b32.cont [3/16] 0.0, 128
        %1397 = vxpose.xlu0.b32.cont [4/16] 0.0, 128
        %1398 = vxpose.xlu0.b32.cont [5/16] 0.0, 128
        %1399 = vxpose.xlu0.b32.cont [6/16] 0.0, 128
        %1400 = vxpose.xlu0.b32.cont [7/16] 0.0, 128
        %1401 = vxpose.xlu0.b32.cont [8/16] 0.0, 128
        %1402 = vxpose.xlu0.b32.cont [9/16] 0.0, 128
        %1403 = vxpose.xlu0.b32.cont [10/16] 0.0, 128
        %1404 = vxpose.xlu0.b32.cont [11/16] 0.0, 128
        %1405 = vxpose.xlu0.b32.cont [12/16] 0.0, 128
        %1406 = vxpose.xlu0.b32.cont [13/16] 0.0, 128
        %1407 = vxpose.xlu0.b32.cont [14/16] 0.0, 128
        %1408 = vxpose.xlu0.b32.cont [15/16] 0.0, 128
        %1409 = vxpose.xlu0.b32.end [16/16] 0.0, 128
        %v1410 = vpop.trf.xlu0
        %v1411 = vpop.trf.xlu0
        %v1412 = vpop.trf.xlu0
        %v1413 = vpop.trf.xlu0
        %v1414 = vpop.trf.xlu0
        %v1415 = vpop.trf.xlu0
        %v1416 = vpop.trf.xlu0
        %v1417 = vpop.trf.xlu0
        %v1418 = vpop.trf.xlu0
        %v1419 = vpop.trf.xlu0
        %v1420 = vpop.trf.xlu0
        %v1421 = vpop.trf.xlu0
        %v1422 = vpop.trf.xlu0
        %v1423 = vpop.trf.xlu0
        %v1424 = vpop.trf.xlu0
        %v1425 = vpop.trf.xlu0
        %v1427 = vsel %vm669, %v1410, 0
        %1429 = vmatprep.subr.mxu0 0.0
        %1430 = vmatpush1.msra.mxu0 0.0
        %1431 = vmatprep.subr.mxu0 0.0
        %1432 = vmatpush1.msra.mxu0 0.0
        %1433 = vmatprep.subr.mxu0 0.0
        %1434 = vmatpush1.msra.mxu0 0.0
        %1435 = vmatprep.subr.mxu0 0.0
        %1436 = vmatpush1.msra.mxu0 0.0
        %1437 = vmatprep.subr.mxu0 0.0
        %1438 = vmatpush1.msra.mxu0 0.0
        %1439 = vmatprep.subr.mxu0 0.0
        %1440 = vmatpush1.msra.mxu0 0.0
        %1441 = vmatprep.subr.mxu0 0.0
        %1442 = vmatpush1.msra.mxu0 0.0
        %1443 = vmatprep.subr.mxu0 0.0
        %1444 = vmatpush1.msra.mxu0 0.0
        %1445 = vmatprep.subr.mxu0 0.0
        %1446 = vmatpush1.msra.mxu0 0.0
        %1447 = vmatprep.subr.mxu0 0.0
        %1448 = vmatpush1.msra.mxu0 0.0
        %1449 = vmatprep.subr.mxu0 0.0
        %1450 = vmatpush1.msra.mxu0 0.0
        %1451 = vmatprep.subr.mxu0 0.0
        %1452 = vmatpush1.msra.mxu0 0.0
        %1453 = vmatprep.subr.mxu0 0.0
        %1454 = vmatpush1.msra.mxu0 0.0
        %1455 = vmatprep.subr.mxu0 0.0
        %1456 = vmatpush1.msra.mxu0 0.0
        %1457 = vmatprep.subr.mxu0 0.0
        %1458 = vmatpush1.msra.mxu0 0.0
        %1459 = vmatprep.subr.mxu0 0.0
        %1460 = vmatpush1.msra.mxu0 %v217
        %1461 = vmatprep.subr.mxu0 0.0
        %1462 = vmatpush2.msra.mxu0 0.0
        %1463 = vmatprep.subr.mxu0 0.0
        %1464 = vmatpush2.msra.mxu0 0.0
        %1465 = vmatprep.subr.mxu0 0.0
        %1466 = vmatpush2.msra.mxu0 0.0
        %1467 = vmatprep.subr.mxu0 0.0
        %1468 = vmatpush2.msra.mxu0 0.0
        %1469 = vmatprep.subr.mxu0 0.0
        %1470 = vmatpush2.msra.mxu0 0.0
        %1471 = vmatprep.subr.mxu0 0.0
        %1472 = vmatpush2.msra.mxu0 0.0
        %1473 = vmatprep.subr.mxu0 0.0
        %1474 = vmatpush2.msra.mxu0 0.0
        %1475 = vmatprep.subr.mxu0 0.0
        %1476 = vmatpush2.msra.mxu0 0.0
        %1477 = vmatprep.subr.mxu0 0.0
        %1478 = vmatpush2.msra.mxu0 0.0
        %1479 = vmatprep.subr.mxu0 0.0
        %1480 = vmatpush2.msra.mxu0 0.0
        %1481 = vmatprep.subr.mxu0 0.0
        %1482 = vmatpush2.msra.mxu0 0.0
        %1483 = vmatprep.subr.mxu0 0.0
        %1484 = vmatpush2.msra.mxu0 0.0
        %1485 = vmatprep.subr.mxu0 0.0
        %1486 = vmatpush2.msra.mxu0 0.0
        %1487 = vmatprep.subr.mxu0 0.0
        %1488 = vmatpush2.msra.mxu0 0.0
        %1489 = vmatprep.subr.mxu0 0.0
        %1490 = vmatpush2.msra.mxu0 0.0
        %1491 = vmatprep.subr.mxu0 0.0
        %1492 = vmatpush2.msra.mxu0 0.0
        %1493 = vmatprep.mubr.f32.mxu0 0.0
        %1494 = vmatmul.mubr.f32.gmra.mxu0 %v1427
        %v1495 = vpop.f32.mrf.mxu0
        %v1496 = vadd.f32 0.0, %v1495
        %v1497 = vpop.f32.mrf.mxu0
        %1498 = vdwg.mxu0
        %1499 = vxpose.xlu0.b32.start [1/16] %v963, 128
        %1500 = vxpose.xlu0.b32.cont [2/16] 0.0, 128
        %1501 = vxpose.xlu0.b32.cont [3/16] 0.0, 128
        %1502 = vxpose.xlu0.b32.cont [4/16] 0.0, 128
        %1503 = vxpose.xlu0.b32.cont [5/16] 0.0, 128
        %1504 = vxpose.xlu0.b32.cont [6/16] 0.0, 128
        %1505 = vxpose.xlu0.b32.cont [7/16] 0.0, 128
        %1506 = vxpose.xlu0.b32.cont [8/16] 0.0, 128
        %1507 = vxpose.xlu0.b32.cont [9/16] 0.0, 128
        %1508 = vxpose.xlu0.b32.cont [10/16] 0.0, 128
        %1509 = vxpose.xlu0.b32.cont [11/16] 0.0, 128
        %1510 = vxpose.xlu0.b32.cont [12/16] 0.0, 128
        %1511 = vxpose.xlu0.b32.cont [13/16] 0.0, 128
        %1512 = vxpose.xlu0.b32.cont [14/16] 0.0, 128
        %1513 = vxpose.xlu0.b32.cont [15/16] 0.0, 128
        %1514 = vxpose.xlu0.b32.end [16/16] 0.0, 128
        %v1515 = vpop.trf.xlu0
        %v1516 = vpop.trf.xlu0
        %v1517 = vpop.trf.xlu0
        %v1518 = vpop.trf.xlu0
        %v1519 = vpop.trf.xlu0
        %v1520 = vpop.trf.xlu0
        %v1521 = vpop.trf.xlu0
        %v1522 = vpop.trf.xlu0
        %v1523 = vpop.trf.xlu0
        %v1524 = vpop.trf.xlu0
        %v1525 = vpop.trf.xlu0
        %v1526 = vpop.trf.xlu0
        %v1527 = vpop.trf.xlu0
        %v1528 = vpop.trf.xlu0
        %v1529 = vpop.trf.xlu0
        %v1530 = vpop.trf.xlu0
        %v1532 = vsel %vm669, %v1515, 0
        %1534 = vmatprep.subr.mxu0 0.0
        %1535 = vmatpush1.msra.mxu0 0.0
        %1536 = vmatprep.subr.mxu0 0.0
        %1537 = vmatpush1.msra.mxu0 0.0
        %1538 = vmatprep.subr.mxu0 0.0
        %1539 = vmatpush1.msra.mxu0 0.0
        %1540 = vmatprep.subr.mxu0 0.0
        %1541 = vmatpush1.msra.mxu0 0.0
        %1542 = vmatprep.subr.mxu0 0.0
        %1543 = vmatpush1.msra.mxu0 0.0
        %1544 = vmatprep.subr.mxu0 0.0
        %1545 = vmatpush1.msra.mxu0 0.0
        %1546 = vmatprep.subr.mxu0 0.0
        %1547 = vmatpush1.msra.mxu0 0.0
        %1548 = vmatprep.subr.mxu0 0.0
        %1549 = vmatpush1.msra.mxu0 0.0
        %1550 = vmatprep.subr.mxu0 0.0
        %1551 = vmatpush1.msra.mxu0 0.0
        %1552 = vmatprep.subr.mxu0 0.0
        %1553 = vmatpush1.msra.mxu0 0.0
        %1554 = vmatprep.subr.mxu0 0.0
        %1555 = vmatpush1.msra.mxu0 0.0
        %1556 = vmatprep.subr.mxu0 0.0
        %1557 = vmatpush1.msra.mxu0 0.0
        %1558 = vmatprep.subr.mxu0 0.0
        %1559 = vmatpush1.msra.mxu0 0.0
        %1560 = vmatprep.subr.mxu0 0.0
        %1561 = vmatpush1.msra.mxu0 0.0
        %1562 = vmatprep.subr.mxu0 0.0
        %1563 = vmatpush1.msra.mxu0 0.0
        %1564 = vmatprep.subr.mxu0 0.0
        %1565 = vmatpush1.msra.mxu0 %v218
        %1566 = vmatprep.subr.mxu0 0.0
        %1567 = vmatpush2.msra.mxu0 0.0
        %1568 = vmatprep.subr.mxu0 0.0
        %1569 = vmatpush2.msra.mxu0 0.0
        %1570 = vmatprep.subr.mxu0 0.0
        %1571 = vmatpush2.msra.mxu0 0.0
        %1572 = vmatprep.subr.mxu0 0.0
        %1573 = vmatpush2.msra.mxu0 0.0
        %1574 = vmatprep.subr.mxu0 0.0
        %1575 = vmatpush2.msra.mxu0 0.0
        %1576 = vmatprep.subr.mxu0 0.0
        %1577 = vmatpush2.msra.mxu0 0.0
        %1578 = vmatprep.subr.mxu0 0.0
        %1579 = vmatpush2.msra.mxu0 0.0
        %1580 = vmatprep.subr.mxu0 0.0
        %1581 = vmatpush2.msra.mxu0 0.0
        %1582 = vmatprep.subr.mxu0 0.0
        %1583 = vmatpush2.msra.mxu0 0.0
        %1584 = vmatprep.subr.mxu0 0.0
        %1585 = vmatpush2.msra.mxu0 0.0
        %1586 = vmatprep.subr.mxu0 0.0
        %1587 = vmatpush2.msra.mxu0 0.0
        %1588 = vmatprep.subr.mxu0 0.0
        %1589 = vmatpush2.msra.mxu0 0.0
        %1590 = vmatprep.subr.mxu0 0.0
        %1591 = vmatpush2.msra.mxu0 0.0
        %1592 = vmatprep.subr.mxu0 0.0
        %1593 = vmatpush2.msra.mxu0 0.0
        %1594 = vmatprep.subr.mxu0 0.0
        %1595 = vmatpush2.msra.mxu0 0.0
        %1596 = vmatprep.subr.mxu0 0.0
        %1597 = vmatpush2.msra.mxu0 0.0
        %1598 = vmatprep.mubr.f32.mxu0 0.0
        %1599 = vmatmul.mubr.f32.gmra.mxu0 %v1532
        %v1600 = vpop.f32.mrf.mxu0
        %v1601 = vadd.f32 0.0, %v1600
        %v1602 = vpop.f32.mrf.mxu0
        %1603 = vdwg.mxu0
        %1604 = vxpose.xlu0.b32.start [1/16] %v964, 128
        %1605 = vxpose.xlu0.b32.cont [2/16] 0.0, 128
        %1606 = vxpose.xlu0.b32.cont [3/16] 0.0, 128
        %1607 = vxpose.xlu0.b32.cont [4/16] 0.0, 128
        %1608 = vxpose.xlu0.b32.cont [5/16] 0.0, 128
        %1609 = vxpose.xlu0.b32.cont [6/16] 0.0, 128
        %1610 = vxpose.xlu0.b32.cont [7/16] 0.0, 128
        %1611 = vxpose.xlu0.b32.cont [8/16] 0.0, 128
        %1612 = vxpose.xlu0.b32.cont [9/16] 0.0, 128
        %1613 = vxpose.xlu0.b32.cont [10/16] 0.0, 128
        %1614 = vxpose.xlu0.b32.cont [11/16] 0.0, 128
        %1615 = vxpose.xlu0.b32.cont [12/16] 0.0, 128
        %1616 = vxpose.xlu0.b32.cont [13/16] 0.0, 128
        %1617 = vxpose.xlu0.b32.cont [14/16] 0.0, 128
        %1618 = vxpose.xlu0.b32.cont [15/16] 0.0, 128
        %1619 = vxpose.xlu0.b32.end [16/16] 0.0, 128
        %v1620 = vpop.trf.xlu0
        %v1621 = vpop.trf.xlu0
        %v1622 = vpop.trf.xlu0
        %v1623 = vpop.trf.xlu0
        %v1624 = vpop.trf.xlu0
        %v1625 = vpop.trf.xlu0
        %v1626 = vpop.trf.xlu0
        %v1627 = vpop.trf.xlu0
        %v1628 = vpop.trf.xlu0
        %v1629 = vpop.trf.xlu0
        %v1630 = vpop.trf.xlu0
        %v1631 = vpop.trf.xlu0
        %v1632 = vpop.trf.xlu0
        %v1633 = vpop.trf.xlu0
        %v1634 = vpop.trf.xlu0
        %v1635 = vpop.trf.xlu0
        %v1637 = vsel %vm669, %v1620, 0
        %1639 = vmatprep.subr.mxu0 0.0
        %1640 = vmatpush1.msra.mxu0 0.0
        %1641 = vmatprep.subr.mxu0 0.0
        %1642 = vmatpush1.msra.mxu0 0.0
        %1643 = vmatprep.subr.mxu0 0.0
        %1644 = vmatpush1.msra.mxu0 0.0
        %1645 = vmatprep.subr.mxu0 0.0
        %1646 = vmatpush1.msra.mxu0 0.0
        %1647 = vmatprep.subr.mxu0 0.0
        %1648 = vmatpush1.msra.mxu0 0.0
        %1649 = vmatprep.subr.mxu0 0.0
        %1650 = vmatpush1.msra.mxu0 0.0
        %1651 = vmatprep.subr.mxu0 0.0
        %1652 = vmatpush1.msra.mxu0 0.0
        %1653 = vmatprep.subr.mxu0 0.0
        %1654 = vmatpush1.msra.mxu0 0.0
        %1655 = vmatprep.subr.mxu0 0.0
        %1656 = vmatpush1.msra.mxu0 0.0
        %1657 = vmatprep.subr.mxu0 0.0
        %1658 = vmatpush1.msra.mxu0 0.0
        %1659 = vmatprep.subr.mxu0 0.0
        %1660 = vmatpush1.msra.mxu0 0.0
        %1661 = vmatprep.subr.mxu0 0.0
        %1662 = vmatpush1.msra.mxu0 0.0
        %1663 = vmatprep.subr.mxu0 0.0
        %1664 = vmatpush1.msra.mxu0 0.0
        %1665 = vmatprep.subr.mxu0 0.0
        %1666 = vmatpush1.msra.mxu0 0.0
        %1667 = vmatprep.subr.mxu0 0.0
        %1668 = vmatpush1.msra.mxu0 0.0
        %1669 = vmatprep.subr.mxu0 0.0
        %1670 = vmatpush1.msra.mxu0 %v219
        %1671 = vmatprep.subr.mxu0 0.0
        %1672 = vmatpush2.msra.mxu0 0.0
        %1673 = vmatprep.subr.mxu0 0.0
        %1674 = vmatpush2.msra.mxu0 0.0
        %1675 = vmatprep.subr.mxu0 0.0
        %1676 = vmatpush2.msra.mxu0 0.0
        %1677 = vmatprep.subr.mxu0 0.0
        %1678 = vmatpush2.msra.mxu0 0.0
        %1679 = vmatprep.subr.mxu0 0.0
        %1680 = vmatpush2.msra.mxu0 0.0
        %1681 = vmatprep.subr.mxu0 0.0
        %1682 = vmatpush2.msra.mxu0 0.0
        %1683 = vmatprep.subr.mxu0 0.0
        %1684 = vmatpush2.msra.mxu0 0.0
        %1685 = vmatprep.subr.mxu0 0.0
        %1686 = vmatpush2.msra.mxu0 0.0
        %1687 = vmatprep.subr.mxu0 0.0
        %1688 = vmatpush2.msra.mxu0 0.0
        %1689 = vmatprep.subr.mxu0 0.0
        %1690 = vmatpush2.msra.mxu0 0.0
        %1691 = vmatprep.subr.mxu0 0.0
        %1692 = vmatpush2.msra.mxu0 0.0
        %1693 = vmatprep.subr.mxu0 0.0
        %1694 = vmatpush2.msra.mxu0 0.0
        %1695 = vmatprep.subr.mxu0 0.0
        %1696 = vmatpush2.msra.mxu0 0.0
        %1697 = vmatprep.subr.mxu0 0.0
        %1698 = vmatpush2.msra.mxu0 0.0
        %1699 = vmatprep.subr.mxu0 0.0
        %1700 = vmatpush2.msra.mxu0 0.0
        %1701 = vmatprep.subr.mxu0 0.0
        %1702 = vmatpush2.msra.mxu0 0.0
        %1703 = vmatprep.mubr.f32.mxu0 0.0
        %1704 = vmatmul.mubr.f32.gmra.mxu0 %v1637
        %v1705 = vpop.f32.mrf.mxu0
        %v1706 = vadd.f32 0.0, %v1705
        %v1707 = vpop.f32.mrf.mxu0
        %1708 = vdwg.mxu0
        %1709 = vxpose.xlu0.b32.start [1/16] %v965, 128
        %1710 = vxpose.xlu0.b32.cont [2/16] 0.0, 128
        %1711 = vxpose.xlu0.b32.cont [3/16] 0.0, 128
        %1712 = vxpose.xlu0.b32.cont [4/16] 0.0, 128
        %1713 = vxpose.xlu0.b32.cont [5/16] 0.0, 128
        %1714 = vxpose.xlu0.b32.cont [6/16] 0.0, 128
        %1715 = vxpose.xlu0.b32.cont [7/16] 0.0, 128
        %1716 = vxpose.xlu0.b32.cont [8/16] 0.0, 128
        %1717 = vxpose.xlu0.b32.cont [9/16] 0.0, 128
        %1718 = vxpose.xlu0.b32.cont [10/16] 0.0, 128
        %1719 = vxpose.xlu0.b32.cont [11/16] 0.0, 128
        %1720 = vxpose.xlu0.b32.cont [12/16] 0.0, 128
        %1721 = vxpose.xlu0.b32.cont [13/16] 0.0, 128
        %1722 = vxpose.xlu0.b32.cont [14/16] 0.0, 128
        %1723 = vxpose.xlu0.b32.cont [15/16] 0.0, 128
        %1724 = vxpose.xlu0.b32.end [16/16] 0.0, 128
        %v1725 = vpop.trf.xlu0
        %v1726 = vpop.trf.xlu0
        %v1727 = vpop.trf.xlu0
        %v1728 = vpop.trf.xlu0
        %v1729 = vpop.trf.xlu0
        %v1730 = vpop.trf.xlu0
        %v1731 = vpop.trf.xlu0
        %v1732 = vpop.trf.xlu0
        %v1733 = vpop.trf.xlu0
        %v1734 = vpop.trf.xlu0
        %v1735 = vpop.trf.xlu0
        %v1736 = vpop.trf.xlu0
        %v1737 = vpop.trf.xlu0
        %v1738 = vpop.trf.xlu0
        %v1739 = vpop.trf.xlu0
        %v1740 = vpop.trf.xlu0
        %v1742 = vsel %vm669, %v1725, 0
        %1744 = vmatprep.subr.mxu0 0.0
        %1745 = vmatpush1.msra.mxu0 0.0
        %1746 = vmatprep.subr.mxu0 0.0
        %1747 = vmatpush1.msra.mxu0 0.0
        %1748 = vmatprep.subr.mxu0 0.0
        %1749 = vmatpush1.msra.mxu0 0.0
        %1750 = vmatprep.subr.mxu0 0.0
        %1751 = vmatpush1.msra.mxu0 0.0
        %1752 = vmatprep.subr.mxu0 0.0
        %1753 = vmatpush1.msra.mxu0 0.0
        %1754 = vmatprep.subr.mxu0 0.0
        %1755 = vmatpush1.msra.mxu0 0.0
        %1756 = vmatprep.subr.mxu0 0.0
        %1757 = vmatpush1.msra.mxu0 0.0
        %1758 = vmatprep.subr.mxu0 0.0
        %1759 = vmatpush1.msra.mxu0 0.0
        %1760 = vmatprep.subr.mxu0 0.0
        %1761 = vmatpush1.msra.mxu0 0.0
        %1762 = vmatprep.subr.mxu0 0.0
        %1763 = vmatpush1.msra.mxu0 0.0
        %1764 = vmatprep.subr.mxu0 0.0
        %1765 = vmatpush1.msra.mxu0 0.0
        %1766 = vmatprep.subr.mxu0 0.0
        %1767 = vmatpush1.msra.mxu0 0.0
        %1768 = vmatprep.subr.mxu0 0.0
        %1769 = vmatpush1.msra.mxu0 0.0
        %1770 = vmatprep.subr.mxu0 0.0
        %1771 = vmatpush1.msra.mxu0 0.0
        %1772 = vmatprep.subr.mxu0 0.0
        %1773 = vmatpush1.msra.mxu0 0.0
        %1774 = vmatprep.subr.mxu0 0.0
        %1775 = vmatpush1.msra.mxu0 %v220
        %1776 = vmatprep.subr.mxu0 0.0
        %1777 = vmatpush2.msra.mxu0 0.0
        %1778 = vmatprep.subr.mxu0 0.0
        %1779 = vmatpush2.msra.mxu0 0.0
        %1780 = vmatprep.subr.mxu0 0.0
        %1781 = vmatpush2.msra.mxu0 0.0
        %1782 = vmatprep.subr.mxu0 0.0
        %1783 = vmatpush2.msra.mxu0 0.0
        %1784 = vmatprep.subr.mxu0 0.0
        %1785 = vmatpush2.msra.mxu0 0.0
        %1786 = vmatprep.subr.mxu0 0.0
        %1787 = vmatpush2.msra.mxu0 0.0
        %1788 = vmatprep.subr.mxu0 0.0
        %1789 = vmatpush2.msra.mxu0 0.0
        %1790 = vmatprep.subr.mxu0 0.0
        %1791 = vmatpush2.msra.mxu0 0.0
        %1792 = vmatprep.subr.mxu0 0.0
        %1793 = vmatpush2.msra.mxu0 0.0
        %1794 = vmatprep.subr.mxu0 0.0
        %1795 = vmatpush2.msra.mxu0 0.0
        %1796 = vmatprep.subr.mxu0 0.0
        %1797 = vmatpush2.msra.mxu0 0.0
        %1798 = vmatprep.subr.mxu0 0.0
        %1799 = vmatpush2.msra.mxu0 0.0
        %1800 = vmatprep.subr.mxu0 0.0
        %1801 = vmatpush2.msra.mxu0 0.0
        %1802 = vmatprep.subr.mxu0 0.0
        %1803 = vmatpush2.msra.mxu0 0.0
        %1804 = vmatprep.subr.mxu0 0.0
        %1805 = vmatpush2.msra.mxu0 0.0
        %1806 = vmatprep.subr.mxu0 0.0
        %1807 = vmatpush2.msra.mxu0 0.0
        %1808 = vmatprep.mubr.f32.mxu0 0.0
        %1809 = vmatmul.mubr.f32.gmra.mxu0 %v1742
        %v1810 = vpop.f32.mrf.mxu0
        %v1811 = vadd.f32 0.0, %v1810
        %v1812 = vpop.f32.mrf.mxu0
        %1813 = vdwg.mxu0
        %1814 = vxpose.xlu0.b32.start [1/16] %v966, 128
        %1815 = vxpose.xlu0.b32.cont [2/16] 0.0, 128
        %1816 = vxpose.xlu0.b32.cont [3/16] 0.0, 128
        %1817 = vxpose.xlu0.b32.cont [4/16] 0.0, 128
        %1818 = vxpose.xlu0.b32.cont [5/16] 0.0, 128
        %1819 = vxpose.xlu0.b32.cont [6/16] 0.0, 128
        %1820 = vxpose.xlu0.b32.cont [7/16] 0.0, 128
        %1821 = vxpose.xlu0.b32.cont [8/16] 0.0, 128
        %1822 = vxpose.xlu0.b32.cont [9/16] 0.0, 128
        %1823 = vxpose.xlu0.b32.cont [10/16] 0.0, 128
        %1824 = vxpose.xlu0.b32.cont [11/16] 0.0, 128
        %1825 = vxpose.xlu0.b32.cont [12/16] 0.0, 128
        %1826 = vxpose.xlu0.b32.cont [13/16] 0.0, 128
        %1827 = vxpose.xlu0.b32.cont [14/16] 0.0, 128
        %1828 = vxpose.xlu0.b32.cont [15/16] 0.0, 128
        %1829 = vxpose.xlu0.b32.end [16/16] 0.0, 128
        %v1830 = vpop.trf.xlu0
        %v1831 = vpop.trf.xlu0
        %v1832 = vpop.trf.xlu0
        %v1833 = vpop.trf.xlu0
        %v1834 = vpop.trf.xlu0
        %v1835 = vpop.trf.xlu0
        %v1836 = vpop.trf.xlu0
        %v1837 = vpop.trf.xlu0
        %v1838 = vpop.trf.xlu0
        %v1839 = vpop.trf.xlu0
        %v1840 = vpop.trf.xlu0
        %v1841 = vpop.trf.xlu0
        %v1842 = vpop.trf.xlu0
        %v1843 = vpop.trf.xlu0
        %v1844 = vpop.trf.xlu0
        %v1845 = vpop.trf.xlu0
        %v1847 = vsel %vm669, %v1830, 0
        %1849 = vmatprep.subr.mxu0 0.0
        %1850 = vmatpush1.msra.mxu0 0.0
        %1851 = vmatprep.subr.mxu0 0.0
        %1852 = vmatpush1.msra.mxu0 0.0
        %1853 = vmatprep.subr.mxu0 0.0
        %1854 = vmatpush1.msra.mxu0 0.0
        %1855 = vmatprep.subr.mxu0 0.0
        %1856 = vmatpush1.msra.mxu0 0.0
        %1857 = vmatprep.subr.mxu0 0.0
        %1858 = vmatpush1.msra.mxu0 0.0
        %1859 = vmatprep.subr.mxu0 0.0
        %1860 = vmatpush1.msra.mxu0 0.0
        %1861 = vmatprep.subr.mxu0 0.0
        %1862 = vmatpush1.msra.mxu0 0.0
        %1863 = vmatprep.subr.mxu0 0.0
        %1864 = vmatpush1.msra.mxu0 0.0
        %1865 = vmatprep.subr.mxu0 0.0
        %1866 = vmatpush1.msra.mxu0 0.0
        %1867 = vmatprep.subr.mxu0 0.0
        %1868 = vmatpush1.msra.mxu0 0.0
        %1869 = vmatprep.subr.mxu0 0.0
        %1870 = vmatpush1.msra.mxu0 0.0
        %1871 = vmatprep.subr.mxu0 0.0
        %1872 = vmatpush1.msra.mxu0 0.0
        %1873 = vmatprep.subr.mxu0 0.0
        %1874 = vmatpush1.msra.mxu0 0.0
        %1875 = vmatprep.subr.mxu0 0.0
        %1876 = vmatpush1.msra.mxu0 0.0
        %1877 = vmatprep.subr.mxu0 0.0
        %1878 = vmatpush1.msra.mxu0 0.0
        %1879 = vmatprep.subr.mxu0 0.0
        %1880 = vmatpush1.msra.mxu0 %v221
        %1881 = vmatprep.subr.mxu0 0.0
        %1882 = vmatpush2.msra.mxu0 0.0
        %1883 = vmatprep.subr.mxu0 0.0
        %1884 = vmatpush2.msra.mxu0 0.0
        %1885 = vmatprep.subr.mxu0 0.0
        %1886 = vmatpush2.msra.mxu0 0.0
        %1887 = vmatprep.subr.mxu0 0.0
        %1888 = vmatpush2.msra.mxu0 0.0
        %1889 = vmatprep.subr.mxu0 0.0
        %1890 = vmatpush2.msra.mxu0 0.0
        %1891 = vmatprep.subr.mxu0 0.0
        %1892 = vmatpush2.msra.mxu0 0.0
        %1893 = vmatprep.subr.mxu0 0.0
        %1894 = vmatpush2.msra.mxu0 0.0
        %1895 = vmatprep.subr.mxu0 0.0
        %1896 = vmatpush2.msra.mxu0 0.0
        %1897 = vmatprep.subr.mxu0 0.0
        %1898 = vmatpush2.msra.mxu0 0.0
        %1899 = vmatprep.subr.mxu0 0.0
        %1900 = vmatpush2.msra.mxu0 0.0
        %1901 = vmatprep.subr.mxu0 0.0
        %1902 = vmatpush2.msra.mxu0 0.0
        %1903 = vmatprep.subr.mxu0 0.0
        %1904 = vmatpush2.msra.mxu0 0.0
        %1905 = vmatprep.subr.mxu0 0.0
        %1906 = vmatpush2.msra.mxu0 0.0
        %1907 = vmatprep.subr.mxu0 0.0
        %1908 = vmatpush2.msra.mxu0 0.0
        %1909 = vmatprep.subr.mxu0 0.0
        %1910 = vmatpush2.msra.mxu0 0.0
        %1911 = vmatprep.subr.mxu0 0.0
        %1912 = vmatpush2.msra.mxu0 0.0
        %1913 = vmatprep.mubr.f32.mxu0 0.0
        %1914 = vmatmul.mubr.f32.gmra.mxu0 %v1847
        %v1915 = vpop.f32.mrf.mxu0
        %v1916 = vadd.f32 0.0, %v1915
        %v1917 = vpop.f32.mrf.mxu0
        %1918 = vdwg.mxu0
        %1919 = vxpose.xlu0.b32.start [1/16] %v967, 128
        %1920 = vxpose.xlu0.b32.cont [2/16] 0.0, 128
        %1921 = vxpose.xlu0.b32.cont [3/16] 0.0, 128
        %1922 = vxpose.xlu0.b32.cont [4/16] 0.0, 128
        %1923 = vxpose.xlu0.b32.cont [5/16] 0.0, 128
        %1924 = vxpose.xlu0.b32.cont [6/16] 0.0, 128
        %1925 = vxpose.xlu0.b32.cont [7/16] 0.0, 128
        %1926 = vxpose.xlu0.b32.cont [8/16] 0.0, 128
        %1927 = vxpose.xlu0.b32.cont [9/16] 0.0, 128
        %1928 = vxpose.xlu0.b32.cont [10/16] 0.0, 128
        %1929 = vxpose.xlu0.b32.cont [11/16] 0.0, 128
        %1930 = vxpose.xlu0.b32.cont [12/16] 0.0, 128
        %1931 = vxpose.xlu0.b32.cont [13/16] 0.0, 128
        %1932 = vxpose.xlu0.b32.cont [14/16] 0.0, 128
        %1933 = vxpose.xlu0.b32.cont [15/16] 0.0, 128
        %1934 = vxpose.xlu0.b32.end [16/16] 0.0, 128
        %v1935 = vpop.trf.xlu0
        %v1936 = vpop.trf.xlu0
        %v1937 = vpop.trf.xlu0
        %v1938 = vpop.trf.xlu0
        %v1939 = vpop.trf.xlu0
        %v1940 = vpop.trf.xlu0
        %v1941 = vpop.trf.xlu0
        %v1942 = vpop.trf.xlu0
        %v1943 = vpop.trf.xlu0
        %v1944 = vpop.trf.xlu0
        %v1945 = vpop.trf.xlu0
        %v1946 = vpop.trf.xlu0
        %v1947 = vpop.trf.xlu0
        %v1948 = vpop.trf.xlu0
        %v1949 = vpop.trf.xlu0
        %v1950 = vpop.trf.xlu0
        %v1952 = vsel %vm669, %v1935, 0
        %1954 = vmatprep.subr.mxu0 0.0
        %1955 = vmatpush1.msra.mxu0 0.0
        %1956 = vmatprep.subr.mxu0 0.0
        %1957 = vmatpush1.msra.mxu0 0.0
        %1958 = vmatprep.subr.mxu0 0.0
        %1959 = vmatpush1.msra.mxu0 0.0
        %1960 = vmatprep.subr.mxu0 0.0
        %1961 = vmatpush1.msra.mxu0 0.0
        %1962 = vmatprep.subr.mxu0 0.0
        %1963 = vmatpush1.msra.mxu0 0.0
        %1964 = vmatprep.subr.mxu0 0.0
        %1965 = vmatpush1.msra.mxu0 0.0
        %1966 = vmatprep.subr.mxu0 0.0
        %1967 = vmatpush1.msra.mxu0 0.0
        %1968 = vmatprep.subr.mxu0 0.0
        %1969 = vmatpush1.msra.mxu0 0.0
        %1970 = vmatprep.subr.mxu0 0.0
        %1971 = vmatpush1.msra.mxu0 0.0
        %1972 = vmatprep.subr.mxu0 0.0
        %1973 = vmatpush1.msra.mxu0 0.0
        %1974 = vmatprep.subr.mxu0 0.0
        %1975 = vmatpush1.msra.mxu0 0.0
        %1976 = vmatprep.subr.mxu0 0.0
        %1977 = vmatpush1.msra.mxu0 0.0
        %1978 = vmatprep.subr.mxu0 0.0
        %1979 = vmatpush1.msra.mxu0 0.0
        %1980 = vmatprep.subr.mxu0 0.0
        %1981 = vmatpush1.msra.mxu0 0.0
        %1982 = vmatprep.subr.mxu0 0.0
        %1983 = vmatpush1.msra.mxu0 0.0
        %1984 = vmatprep.subr.mxu0 0.0
        %1985 = vmatpush1.msra.mxu0 %v222
        %1986 = vmatprep.subr.mxu0 0.0
        %1987 = vmatpush2.msra.mxu0 0.0
        %1988 = vmatprep.subr.mxu0 0.0
        %1989 = vmatpush2.msra.mxu0 0.0
        %1990 = vmatprep.subr.mxu0 0.0
        %1991 = vmatpush2.msra.mxu0 0.0
        %1992 = vmatprep.subr.mxu0 0.0
        %1993 = vmatpush2.msra.mxu0 0.0
        %1994 = vmatprep.subr.mxu0 0.0
        %1995 = vmatpush2.msra.mxu0 0.0
        %1996 = vmatprep.subr.mxu0 0.0
        %1997 = vmatpush2.msra.mxu0 0.0
        %1998 = vmatprep.subr.mxu0 0.0
        %1999 = vmatpush2.msra.mxu0 0.0
        %2000 = vmatprep.subr.mxu0 0.0
        %2001 = vmatpush2.msra.mxu0 0.0
        %2002 = vmatprep.subr.mxu0 0.0
        %2003 = vmatpush2.msra.mxu0 0.0
        %2004 = vmatprep.subr.mxu0 0.0
        %2005 = vmatpush2.msra.mxu0 0.0
        %2006 = vmatprep.subr.mxu0 0.0
        %2007 = vmatpush2.msra.mxu0 0.0
        %2008 = vmatprep.subr.mxu0 0.0
        %2009 = vmatpush2.msra.mxu0 0.0
        %2010 = vmatprep.subr.mxu0 0.0
        %2011 = vmatpush2.msra.mxu0 0.0
        %2012 = vmatprep.subr.mxu0 0.0
        %2013 = vmatpush2.msra.mxu0 0.0
        %2014 = vmatprep.subr.mxu0 0.0
        %2015 = vmatpush2.msra.mxu0 0.0
        %2016 = vmatprep.subr.mxu0 0.0
        %2017 = vmatpush2.msra.mxu0 0.0
        %2018 = vmatprep.mubr.f32.mxu0 0.0
        %2019 = vmatmul.mubr.f32.gmra.mxu0 %v1952
        %v2020 = vpop.f32.mrf.mxu0
        %v2021 = vadd.f32 0.0, %v2020
        %v2022 = vpop.f32.mrf.mxu0
        %2023 = vdwg.mxu0
        %2024 = vxpose.xlu0.b32.start [1/16] %v968, 128
        %2025 = vxpose.xlu0.b32.cont [2/16] 0.0, 128
        %2026 = vxpose.xlu0.b32.cont [3/16] 0.0, 128
        %2027 = vxpose.xlu0.b32.cont [4/16] 0.0, 128
        %2028 = vxpose.xlu0.b32.cont [5/16] 0.0, 128
        %2029 = vxpose.xlu0.b32.cont [6/16] 0.0, 128
        %2030 = vxpose.xlu0.b32.cont [7/16] 0.0, 128
        %2031 = vxpose.xlu0.b32.cont [8/16] 0.0, 128
        %2032 = vxpose.xlu0.b32.cont [9/16] 0.0, 128
        %2033 = vxpose.xlu0.b32.cont [10/16] 0.0, 128
        %2034 = vxpose.xlu0.b32.cont [11/16] 0.0, 128
        %2035 = vxpose.xlu0.b32.cont [12/16] 0.0, 128
        %2036 = vxpose.xlu0.b32.cont [13/16] 0.0, 128
        %2037 = vxpose.xlu0.b32.cont [14/16] 0.0, 128
        %2038 = vxpose.xlu0.b32.cont [15/16] 0.0, 128
        %2039 = vxpose.xlu0.b32.end [16/16] 0.0, 128
        %v2040 = vpop.trf.xlu0
        %v2041 = vpop.trf.xlu0
        %v2042 = vpop.trf.xlu0
        %v2043 = vpop.trf.xlu0
        %v2044 = vpop.trf.xlu0
        %v2045 = vpop.trf.xlu0
        %v2046 = vpop.trf.xlu0
        %v2047 = vpop.trf.xlu0
        %v2048 = vpop.trf.xlu0
        %v2049 = vpop.trf.xlu0
        %v2050 = vpop.trf.xlu0
        %v2051 = vpop.trf.xlu0
        %v2052 = vpop.trf.xlu0
        %v2053 = vpop.trf.xlu0
        %v2054 = vpop.trf.xlu0
        %v2055 = vpop.trf.xlu0
        %v2057 = vsel %vm669, %v2040, 0
        %2059 = vmatprep.subr.mxu0 0.0
        %2060 = vmatpush1.msra.mxu0 0.0
        %2061 = vmatprep.subr.mxu0 0.0
        %2062 = vmatpush1.msra.mxu0 0.0
        %2063 = vmatprep.subr.mxu0 0.0
        %2064 = vmatpush1.msra.mxu0 0.0
        %2065 = vmatprep.subr.mxu0 0.0
        %2066 = vmatpush1.msra.mxu0 0.0
        %2067 = vmatprep.subr.mxu0 0.0
        %2068 = vmatpush1.msra.mxu0 0.0
        %2069 = vmatprep.subr.mxu0 0.0
        %2070 = vmatpush1.msra.mxu0 0.0
        %2071 = vmatprep.subr.mxu0 0.0
        %2072 = vmatpush1.msra.mxu0 0.0
        %2073 = vmatprep.subr.mxu0 0.0
        %2074 = vmatpush1.msra.mxu0 0.0
        %2075 = vmatprep.subr.mxu0 0.0
        %2076 = vmatpush1.msra.mxu0 0.0
        %2077 = vmatprep.subr.mxu0 0.0
        %2078 = vmatpush1.msra.mxu0 0.0
        %2079 = vmatprep.subr.mxu0 0.0
        %2080 = vmatpush1.msra.mxu0 0.0
        %2081 = vmatprep.subr.mxu0 0.0
        %2082 = vmatpush1.msra.mxu0 0.0
        %2083 = vmatprep.subr.mxu0 0.0
        %2084 = vmatpush1.msra.mxu0 0.0
        %2085 = vmatprep.subr.mxu0 0.0
        %2086 = vmatpush1.msra.mxu0 0.0
        %2087 = vmatprep.subr.mxu0 0.0
        %2088 = vmatpush1.msra.mxu0 0.0
        %2089 = vmatprep.subr.mxu0 0.0
        %2090 = vmatpush1.msra.mxu0 %v223
        %2091 = vmatprep.subr.mxu0 0.0
        %2092 = vmatpush2.msra.mxu0 0.0
        %2093 = vmatprep.subr.mxu0 0.0
        %2094 = vmatpush2.msra.mxu0 0.0
        %2095 = vmatprep.subr.mxu0 0.0
        %2096 = vmatpush2.msra.mxu0 0.0
        %2097 = vmatprep.subr.mxu0 0.0
        %2098 = vmatpush2.msra.mxu0 0.0
        %2099 = vmatprep.subr.mxu0 0.0
        %2100 = vmatpush2.msra.mxu0 0.0
        %2101 = vmatprep.subr.mxu0 0.0
        %2102 = vmatpush2.msra.mxu0 0.0
        %2103 = vmatprep.subr.mxu0 0.0
        %2104 = vmatpush2.msra.mxu0 0.0
        %2105 = vmatprep.subr.mxu0 0.0
        %2106 = vmatpush2.msra.mxu0 0.0
        %2107 = vmatprep.subr.mxu0 0.0
        %2108 = vmatpush2.msra.mxu0 0.0
        %2109 = vmatprep.subr.mxu0 0.0
        %2110 = vmatpush2.msra.mxu0 0.0
        %2111 = vmatprep.subr.mxu0 0.0
        %2112 = vmatpush2.msra.mxu0 0.0
        %2113 = vmatprep.subr.mxu0 0.0
        %2114 = vmatpush2.msra.mxu0 0.0
        %2115 = vmatprep.subr.mxu0 0.0
        %2116 = vmatpush2.msra.mxu0 0.0
        %2117 = vmatprep.subr.mxu0 0.0
        %2118 = vmatpush2.msra.mxu0 0.0
        %2119 = vmatprep.subr.mxu0 0.0
        %2120 = vmatpush2.msra.mxu0 0.0
        %2121 = vmatprep.subr.mxu0 0.0
        %2122 = vmatpush2.msra.mxu0 0.0
        %2123 = vmatprep.mubr.f32.mxu0 0.0
        %2124 = vmatmul.mubr.f32.gmra.mxu0 %v2057
        %v2125 = vpop.f32.mrf.mxu0
        %v2126 = vadd.f32 0.0, %v2125
        %v2127 = vpop.f32.mrf.mxu0
        %2128 = vdwg.mxu0
        %2129 = vxpose.xlu0.b32.start [1/16] %v969, 128
        %2130 = vxpose.xlu0.b32.cont [2/16] 0.0, 128
        %2131 = vxpose.xlu0.b32.cont [3/16] 0.0, 128
        %2132 = vxpose.xlu0.b32.cont [4/16] 0.0, 128
        %2133 = vxpose.xlu0.b32.cont [5/16] 0.0, 128
        %2134 = vxpose.xlu0.b32.cont [6/16] 0.0, 128
        %2135 = vxpose.xlu0.b32.cont [7/16] 0.0, 128
        %2136 = vxpose.xlu0.b32.cont [8/16] 0.0, 128
        %2137 = vxpose.xlu0.b32.cont [9/16] 0.0, 128
        %2138 = vxpose.xlu0.b32.cont [10/16] 0.0, 128
        %2139 = vxpose.xlu0.b32.cont [11/16] 0.0, 128
        %2140 = vxpose.xlu0.b32.cont [12/16] 0.0, 128
        %2141 = vxpose.xlu0.b32.cont [13/16] 0.0, 128
        %2142 = vxpose.xlu0.b32.cont [14/16] 0.0, 128
        %2143 = vxpose.xlu0.b32.cont [15/16] 0.0, 128
        %2144 = vxpose.xlu0.b32.end [16/16] 0.0, 128
        %v2145 = vpop.trf.xlu0
        %v2146 = vpop.trf.xlu0
        %v2147 = vpop.trf.xlu0
        %v2148 = vpop.trf.xlu0
        %v2149 = vpop.trf.xlu0
        %v2150 = vpop.trf.xlu0
        %v2151 = vpop.trf.xlu0
        %v2152 = vpop.trf.xlu0
        %v2153 = vpop.trf.xlu0
        %v2154 = vpop.trf.xlu0
        %v2155 = vpop.trf.xlu0
        %v2156 = vpop.trf.xlu0
        %v2157 = vpop.trf.xlu0
        %v2158 = vpop.trf.xlu0
        %v2159 = vpop.trf.xlu0
        %v2160 = vpop.trf.xlu0
        %v2162 = vsel %vm669, %v2145, 0
        %2164 = vmatprep.subr.mxu0 0.0
        %2165 = vmatpush1.msra.mxu0 0.0
        %2166 = vmatprep.subr.mxu0 0.0
        %2167 = vmatpush1.msra.mxu0 0.0
        %2168 = vmatprep.subr.mxu0 0.0
        %2169 = vmatpush1.msra.mxu0 0.0
        %2170 = vmatprep.subr.mxu0 0.0
        %2171 = vmatpush1.msra.mxu0 0.0
        %2172 = vmatprep.subr.mxu0 0.0
        %2173 = vmatpush1.msra.mxu0 0.0
        %2174 = vmatprep.subr.mxu0 0.0
        %2175 = vmatpush1.msra.mxu0 0.0
        %2176 = vmatprep.subr.mxu0 0.0
        %2177 = vmatpush1.msra.mxu0 0.0
        %2178 = vmatprep.subr.mxu0 0.0
        %2179 = vmatpush1.msra.mxu0 0.0
        %2180 = vmatprep.subr.mxu0 0.0
        %2181 = vmatpush1.msra.mxu0 0.0
        %2182 = vmatprep.subr.mxu0 0.0
        %2183 = vmatpush1.msra.mxu0 0.0
        %2184 = vmatprep.subr.mxu0 0.0
        %2185 = vmatpush1.msra.mxu0 0.0
        %2186 = vmatprep.subr.mxu0 0.0
        %2187 = vmatpush1.msra.mxu0 0.0
        %2188 = vmatprep.subr.mxu0 0.0
        %2189 = vmatpush1.msra.mxu0 0.0
        %2190 = vmatprep.subr.mxu0 0.0
        %2191 = vmatpush1.msra.mxu0 0.0
        %2192 = vmatprep.subr.mxu0 0.0
        %2193 = vmatpush1.msra.mxu0 0.0
        %2194 = vmatprep.subr.mxu0 0.0
        %2195 = vmatpush1.msra.mxu0 %v224
        %2196 = vmatprep.subr.mxu0 0.0
        %2197 = vmatpush2.msra.mxu0 0.0
        %2198 = vmatprep.subr.mxu0 0.0
        %2199 = vmatpush2.msra.mxu0 0.0
        %2200 = vmatprep.subr.mxu0 0.0
        %2201 = vmatpush2.msra.mxu0 0.0
        %2202 = vmatprep.subr.mxu0 0.0
        %2203 = vmatpush2.msra.mxu0 0.0
        %2204 = vmatprep.subr.mxu0 0.0
        %2205 = vmatpush2.msra.mxu0 0.0
        %2206 = vmatprep.subr.mxu0 0.0
        %2207 = vmatpush2.msra.mxu0 0.0
        %2208 = vmatprep.subr.mxu0 0.0
        %2209 = vmatpush2.msra.mxu0 0.0
        %2210 = vmatprep.subr.mxu0 0.0
        %2211 = vmatpush2.msra.mxu0 0.0
        %2212 = vmatprep.subr.mxu0 0.0
        %2213 = vmatpush2.msra.mxu0 0.0
        %2214 = vmatprep.subr.mxu0 0.0
        %2215 = vmatpush2.msra.mxu0 0.0
        %2216 = vmatprep.subr.mxu0 0.0
        %2217 = vmatpush2.msra.mxu0 0.0
        %2218 = vmatprep.subr.mxu0 0.0
        %2219 = vmatpush2.msra.mxu0 0.0
        %2220 = vmatprep.subr.mxu0 0.0
        %2221 = vmatpush2.msra.mxu0 0.0
        %2222 = vmatprep.subr.mxu0 0.0
        %2223 = vmatpush2.msra.mxu0 0.0
        %2224 = vmatprep.subr.mxu0 0.0
        %2225 = vmatpush2.msra.mxu0 0.0
        %2226 = vmatprep.subr.mxu0 0.0
        %2227 = vmatpush2.msra.mxu0 0.0
        %2228 = vmatprep.mubr.f32.mxu0 0.0
        %2229 = vmatmul.mubr.f32.gmra.mxu0 %v2162
        %v2230 = vpop.f32.mrf.mxu0
        %v2231 = vadd.f32 0.0, %v2230
        %v2232 = vpop.f32.mrf.mxu0
        %2233 = vdwg.mxu0
        %2234 = vxpose.xlu0.b32.start [1/16] %v970, 128
        %2235 = vxpose.xlu0.b32.cont [2/16] 0.0, 128
        %2236 = vxpose.xlu0.b32.cont [3/16] 0.0, 128
        %2237 = vxpose.xlu0.b32.cont [4/16] 0.0, 128
        %2238 = vxpose.xlu0.b32.cont [5/16] 0.0, 128
        %2239 = vxpose.xlu0.b32.cont [6/16] 0.0, 128
        %2240 = vxpose.xlu0.b32.cont [7/16] 0.0, 128
        %2241 = vxpose.xlu0.b32.cont [8/16] 0.0, 128
        %2242 = vxpose.xlu0.b32.cont [9/16] 0.0, 128
        %2243 = vxpose.xlu0.b32.cont [10/16] 0.0, 128
        %2244 = vxpose.xlu0.b32.cont [11/16] 0.0, 128
        %2245 = vxpose.xlu0.b32.cont [12/16] 0.0, 128
        %2246 = vxpose.xlu0.b32.cont [13/16] 0.0, 128
        %2247 = vxpose.xlu0.b32.cont [14/16] 0.0, 128
        %2248 = vxpose.xlu0.b32.cont [15/16] 0.0, 128
        %2249 = vxpose.xlu0.b32.end [16/16] 0.0, 128
        %v2250 = vpop.trf.xlu0
        %v2251 = vpop.trf.xlu0
        %v2252 = vpop.trf.xlu0
        %v2253 = vpop.trf.xlu0
        %v2254 = vpop.trf.xlu0
        %v2255 = vpop.trf.xlu0
        %v2256 = vpop.trf.xlu0
        %v2257 = vpop.trf.xlu0
        %v2258 = vpop.trf.xlu0
        %v2259 = vpop.trf.xlu0
        %v2260 = vpop.trf.xlu0
        %v2261 = vpop.trf.xlu0
        %v2262 = vpop.trf.xlu0
        %v2263 = vpop.trf.xlu0
        %v2264 = vpop.trf.xlu0
        %v2265 = vpop.trf.xlu0
        %v2267 = vsel %vm669, %v2250, 0
        %2269 = vmatprep.subr.mxu0 0.0
        %2270 = vmatpush1.msra.mxu0 0.0
        %2271 = vmatprep.subr.mxu0 0.0
        %2272 = vmatpush1.msra.mxu0 0.0
        %2273 = vmatprep.subr.mxu0 0.0
        %2274 = vmatpush1.msra.mxu0 0.0
        %2275 = vmatprep.subr.mxu0 0.0
        %2276 = vmatpush1.msra.mxu0 0.0
        %2277 = vmatprep.subr.mxu0 0.0
        %2278 = vmatpush1.msra.mxu0 0.0
        %2279 = vmatprep.subr.mxu0 0.0
        %2280 = vmatpush1.msra.mxu0 0.0
        %2281 = vmatprep.subr.mxu0 0.0
        %2282 = vmatpush1.msra.mxu0 0.0
        %2283 = vmatprep.subr.mxu0 0.0
        %2284 = vmatpush1.msra.mxu0 0.0
        %2285 = vmatprep.subr.mxu0 0.0
        %2286 = vmatpush1.msra.mxu0 0.0
        %2287 = vmatprep.subr.mxu0 0.0
        %2288 = vmatpush1.msra.mxu0 0.0
        %2289 = vmatprep.subr.mxu0 0.0
        %2290 = vmatpush1.msra.mxu0 0.0
        %2291 = vmatprep.subr.mxu0 0.0
        %2292 = vmatpush1.msra.mxu0 0.0
        %2293 = vmatprep.subr.mxu0 0.0
        %2294 = vmatpush1.msra.mxu0 0.0
        %2295 = vmatprep.subr.mxu0 0.0
        %2296 = vmatpush1.msra.mxu0 0.0
        %2297 = vmatprep.subr.mxu0 0.0
        %2298 = vmatpush1.msra.mxu0 0.0
        %2299 = vmatprep.subr.mxu0 0.0
        %2300 = vmatpush1.msra.mxu0 %v225
        %2301 = vmatprep.subr.mxu0 0.0
        %2302 = vmatpush2.msra.mxu0 0.0
        %2303 = vmatprep.subr.mxu0 0.0
        %2304 = vmatpush2.msra.mxu0 0.0
        %2305 = vmatprep.subr.mxu0 0.0
        %2306 = vmatpush2.msra.mxu0 0.0
        %2307 = vmatprep.subr.mxu0 0.0
        %2308 = vmatpush2.msra.mxu0 0.0
        %2309 = vmatprep.subr.mxu0 0.0
        %2310 = vmatpush2.msra.mxu0 0.0
        %2311 = vmatprep.subr.mxu0 0.0
        %2312 = vmatpush2.msra.mxu0 0.0
        %2313 = vmatprep.subr.mxu0 0.0
        %2314 = vmatpush2.msra.mxu0 0.0
        %2315 = vmatprep.subr.mxu0 0.0
        %2316 = vmatpush2.msra.mxu0 0.0
        %2317 = vmatprep.subr.mxu0 0.0
        %2318 = vmatpush2.msra.mxu0 0.0
        %2319 = vmatprep.subr.mxu0 0.0
        %2320 = vmatpush2.msra.mxu0 0.0
        %2321 = vmatprep.subr.mxu0 0.0
        %2322 = vmatpush2.msra.mxu0 0.0
        %2323 = vmatprep.subr.mxu0 0.0
        %2324 = vmatpush2.msra.mxu0 0.0
        %2325 = vmatprep.subr.mxu0 0.0
        %2326 = vmatpush2.msra.mxu0 0.0
        %2327 = vmatprep.subr.mxu0 0.0
        %2328 = vmatpush2.msra.mxu0 0.0
        %2329 = vmatprep.subr.mxu0 0.0
        %2330 = vmatpush2.msra.mxu0 0.0
        %2331 = vmatprep.subr.mxu0 0.0
        %2332 = vmatpush2.msra.mxu0 0.0
        %2333 = vmatprep.mubr.f32.mxu0 0.0
        %2334 = vmatmul.mubr.f32.gmra.mxu0 %v2267
        %v2335 = vpop.f32.mrf.mxu0
        %v2336 = vadd.f32 0.0, %v2335
        %v2337 = vpop.f32.mrf.mxu0
        %2338 = vdwg.mxu0
        %2339 = vxpose.xlu0.b32.start [1/16] %v971, 128
        %2340 = vxpose.xlu0.b32.cont [2/16] 0.0, 128
        %2341 = vxpose.xlu0.b32.cont [3/16] 0.0, 128
        %2342 = vxpose.xlu0.b32.cont [4/16] 0.0, 128
        %2343 = vxpose.xlu0.b32.cont [5/16] 0.0, 128
        %2344 = vxpose.xlu0.b32.cont [6/16] 0.0, 128
        %2345 = vxpose.xlu0.b32.cont [7/16] 0.0, 128
        %2346 = vxpose.xlu0.b32.cont [8/16] 0.0, 128
        %2347 = vxpose.xlu0.b32.cont [9/16] 0.0, 128
        %2348 = vxpose.xlu0.b32.cont [10/16] 0.0, 128
        %2349 = vxpose.xlu0.b32.cont [11/16] 0.0, 128
        %2350 = vxpose.xlu0.b32.cont [12/16] 0.0, 128
        %2351 = vxpose.xlu0.b32.cont [13/16] 0.0, 128
        %2352 = vxpose.xlu0.b32.cont [14/16] 0.0, 128
        %2353 = vxpose.xlu0.b32.cont [15/16] 0.0, 128
        %2354 = vxpose.xlu0.b32.end [16/16] 0.0, 128
        %v2355 = vpop.trf.xlu0
        %v2356 = vpop.trf.xlu0
        %v2357 = vpop.trf.xlu0
        %v2358 = vpop.trf.xlu0
        %v2359 = vpop.trf.xlu0
        %v2360 = vpop.trf.xlu0
        %v2361 = vpop.trf.xlu0
        %v2362 = vpop.trf.xlu0
        %v2363 = vpop.trf.xlu0
        %v2364 = vpop.trf.xlu0
        %v2365 = vpop.trf.xlu0
        %v2366 = vpop.trf.xlu0
        %v2367 = vpop.trf.xlu0
        %v2368 = vpop.trf.xlu0
        %v2369 = vpop.trf.xlu0
        %v2370 = vpop.trf.xlu0
        %v2372 = vsel %vm669, %v2355, 0
        %2374 = vmatprep.subr.mxu0 0.0
        %2375 = vmatpush1.msra.mxu0 0.0
        %2376 = vmatprep.subr.mxu0 0.0
        %2377 = vmatpush1.msra.mxu0 0.0
        %2378 = vmatprep.subr.mxu0 0.0
        %2379 = vmatpush1.msra.mxu0 0.0
        %2380 = vmatprep.subr.mxu0 0.0
        %2381 = vmatpush1.msra.mxu0 0.0
        %2382 = vmatprep.subr.mxu0 0.0
        %2383 = vmatpush1.msra.mxu0 0.0
        %2384 = vmatprep.subr.mxu0 0.0
        %2385 = vmatpush1.msra.mxu0 0.0
        %2386 = vmatprep.subr.mxu0 0.0
        %2387 = vmatpush1.msra.mxu0 0.0
        %2388 = vmatprep.subr.mxu0 0.0
        %2389 = vmatpush1.msra.mxu0 0.0
        %2390 = vmatprep.subr.mxu0 0.0
        %2391 = vmatpush1.msra.mxu0 0.0
        %2392 = vmatprep.subr.mxu0 0.0
        %2393 = vmatpush1.msra.mxu0 0.0
        %2394 = vmatprep.subr.mxu0 0.0
        %2395 = vmatpush1.msra.mxu0 0.0
        %2396 = vmatprep.subr.mxu0 0.0
        %2397 = vmatpush1.msra.mxu0 0.0
        %2398 = vmatprep.subr.mxu0 0.0
        %2399 = vmatpush1.msra.mxu0 0.0
        %2400 = vmatprep.subr.mxu0 0.0
        %2401 = vmatpush1.msra.mxu0 0.0
        %2402 = vmatprep.subr.mxu0 0.0
        %2403 = vmatpush1.msra.mxu0 0.0
        %2404 = vmatprep.subr.mxu0 0.0
        %2405 = vmatpush1.msra.mxu0 %v226
        %2406 = vmatprep.subr.mxu0 0.0
        %2407 = vmatpush2.msra.mxu0 0.0
        %2408 = vmatprep.subr.mxu0 0.0
        %2409 = vmatpush2.msra.mxu0 0.0
        %2410 = vmatprep.subr.mxu0 0.0
        %2411 = vmatpush2.msra.mxu0 0.0
        %2412 = vmatprep.subr.mxu0 0.0
        %2413 = vmatpush2.msra.mxu0 0.0
        %2414 = vmatprep.subr.mxu0 0.0
        %2415 = vmatpush2.msra.mxu0 0.0
        %2416 = vmatprep.subr.mxu0 0.0
        %2417 = vmatpush2.msra.mxu0 0.0
        %2418 = vmatprep.subr.mxu0 0.0
        %2419 = vmatpush2.msra.mxu0 0.0
        %2420 = vmatprep.subr.mxu0 0.0
        %2421 = vmatpush2.msra.mxu0 0.0
        %2422 = vmatprep.subr.mxu0 0.0
        %2423 = vmatpush2.msra.mxu0 0.0
        %2424 = vmatprep.subr.mxu0 0.0
        %2425 = vmatpush2.msra.mxu0 0.0
        %2426 = vmatprep.subr.mxu0 0.0
        %2427 = vmatpush2.msra.mxu0 0.0
        %2428 = vmatprep.subr.mxu0 0.0
        %2429 = vmatpush2.msra.mxu0 0.0
        %2430 = vmatprep.subr.mxu0 0.0
        %2431 = vmatpush2.msra.mxu0 0.0
        %2432 = vmatprep.subr.mxu0 0.0
        %2433 = vmatpush2.msra.mxu0 0.0
        %2434 = vmatprep.subr.mxu0 0.0
        %2435 = vmatpush2.msra.mxu0 0.0
        %2436 = vmatprep.subr.mxu0 0.0
        %2437 = vmatpush2.msra.mxu0 0.0
        %2438 = vmatprep.mubr.f32.mxu0 0.0
        %2439 = vmatmul.mubr.f32.gmra.mxu0 %v2372
        %v2440 = vpop.f32.mrf.mxu0
        %v2441 = vadd.f32 0.0, %v2440
        %v2442 = vpop.f32.mrf.mxu0
        %2443 = vdwg.mxu0
        %2444 = vxpose.xlu0.b32.start [1/16] %v972, 128
        %2445 = vxpose.xlu0.b32.cont [2/16] 0.0, 128
        %2446 = vxpose.xlu0.b32.cont [3/16] 0.0, 128
        %2447 = vxpose.xlu0.b32.cont [4/16] 0.0, 128
        %2448 = vxpose.xlu0.b32.cont [5/16] 0.0, 128
        %2449 = vxpose.xlu0.b32.cont [6/16] 0.0, 128
        %2450 = vxpose.xlu0.b32.cont [7/16] 0.0, 128
        %2451 = vxpose.xlu0.b32.cont [8/16] 0.0, 128
        %2452 = vxpose.xlu0.b32.cont [9/16] 0.0, 128
        %2453 = vxpose.xlu0.b32.cont [10/16] 0.0, 128
        %2454 = vxpose.xlu0.b32.cont [11/16] 0.0, 128
        %2455 = vxpose.xlu0.b32.cont [12/16] 0.0, 128
        %2456 = vxpose.xlu0.b32.cont [13/16] 0.0, 128
        %2457 = vxpose.xlu0.b32.cont [14/16] 0.0, 128
        %2458 = vxpose.xlu0.b32.cont [15/16] 0.0, 128
        %2459 = vxpose.xlu0.b32.end [16/16] 0.0, 128
        %v2460 = vpop.trf.xlu0
        %v2461 = vpop.trf.xlu0
        %v2462 = vpop.trf.xlu0
        %v2463 = vpop.trf.xlu0
        %v2464 = vpop.trf.xlu0
        %v2465 = vpop.trf.xlu0
        %v2466 = vpop.trf.xlu0
        %v2467 = vpop.trf.xlu0
        %v2468 = vpop.trf.xlu0
        %v2469 = vpop.trf.xlu0
        %v2470 = vpop.trf.xlu0
        %v2471 = vpop.trf.xlu0
        %v2472 = vpop.trf.xlu0
        %v2473 = vpop.trf.xlu0
        %v2474 = vpop.trf.xlu0
        %v2475 = vpop.trf.xlu0
        %v2477 = vsel %vm669, %v2460, 0
        %2479 = vmatprep.subr.mxu0 0.0
        %2480 = vmatpush1.msra.mxu0 0.0
        %2481 = vmatprep.subr.mxu0 0.0
        %2482 = vmatpush1.msra.mxu0 0.0
        %2483 = vmatprep.subr.mxu0 0.0
        %2484 = vmatpush1.msra.mxu0 0.0
        %2485 = vmatprep.subr.mxu0 0.0
        %2486 = vmatpush1.msra.mxu0 0.0
        %2487 = vmatprep.subr.mxu0 0.0
        %2488 = vmatpush1.msra.mxu0 0.0
        %2489 = vmatprep.subr.mxu0 0.0
        %2490 = vmatpush1.msra.mxu0 0.0
        %2491 = vmatprep.subr.mxu0 0.0
        %2492 = vmatpush1.msra.mxu0 0.0
        %2493 = vmatprep.subr.mxu0 0.0
        %2494 = vmatpush1.msra.mxu0 0.0
        %2495 = vmatprep.subr.mxu0 0.0
        %2496 = vmatpush1.msra.mxu0 0.0
        %2497 = vmatprep.subr.mxu0 0.0
        %2498 = vmatpush1.msra.mxu0 0.0
        %2499 = vmatprep.subr.mxu0 0.0
        %2500 = vmatpush1.msra.mxu0 0.0
        %2501 = vmatprep.subr.mxu0 0.0
        %2502 = vmatpush1.msra.mxu0 0.0
        %2503 = vmatprep.subr.mxu0 0.0
        %2504 = vmatpush1.msra.mxu0 0.0
        %2505 = vmatprep.subr.mxu0 0.0
        %2506 = vmatpush1.msra.mxu0 0.0
        %2507 = vmatprep.subr.mxu0 0.0
        %2508 = vmatpush1.msra.mxu0 0.0
        %2509 = vmatprep.subr.mxu0 0.0
        %2510 = vmatpush1.msra.mxu0 %v227
        %2511 = vmatprep.subr.mxu0 0.0
        %2512 = vmatpush2.msra.mxu0 0.0
        %2513 = vmatprep.subr.mxu0 0.0
        %2514 = vmatpush2.msra.mxu0 0.0
        %2515 = vmatprep.subr.mxu0 0.0
        %2516 = vmatpush2.msra.mxu0 0.0
        %2517 = vmatprep.subr.mxu0 0.0
        %2518 = vmatpush2.msra.mxu0 0.0
        %2519 = vmatprep.subr.mxu0 0.0
        %2520 = vmatpush2.msra.mxu0 0.0
        %2521 = vmatprep.subr.mxu0 0.0
        %2522 = vmatpush2.msra.mxu0 0.0
        %2523 = vmatprep.subr.mxu0 0.0
        %2524 = vmatpush2.msra.mxu0 0.0
        %2525 = vmatprep.subr.mxu0 0.0
        %2526 = vmatpush2.msra.mxu0 0.0
        %2527 = vmatprep.subr.mxu0 0.0
        %2528 = vmatpush2.msra.mxu0 0.0
        %2529 = vmatprep.subr.mxu0 0.0
        %2530 = vmatpush2.msra.mxu0 0.0
        %2531 = vmatprep.subr.mxu0 0.0
        %2532 = vmatpush2.msra.mxu0 0.0
        %2533 = vmatprep.subr.mxu0 0.0
        %2534 = vmatpush2.msra.mxu0 0.0
        %2535 = vmatprep.subr.mxu0 0.0
        %2536 = vmatpush2.msra.mxu0 0.0
        %2537 = vmatprep.subr.mxu0 0.0
        %2538 = vmatpush2.msra.mxu0 0.0
        %2539 = vmatprep.subr.mxu0 0.0
        %2540 = vmatpush2.msra.mxu0 0.0
        %2541 = vmatprep.subr.mxu0 0.0
        %2542 = vmatpush2.msra.mxu0 0.0
        %2543 = vmatprep.mubr.f32.mxu0 0.0
        %2544 = vmatmul.mubr.f32.gmra.mxu0 %v2477
        %v2545 = vpop.f32.mrf.mxu0
        %v2546 = vadd.f32 0.0, %v2545
        %v2547 = vpop.f32.mrf.mxu0
        %2548 = vdwg.mxu0
        %2549 = vxpose.xlu0.b32.start [1/16] %v973, 128
        %2550 = vxpose.xlu0.b32.cont [2/16] 0.0, 128
        %2551 = vxpose.xlu0.b32.cont [3/16] 0.0, 128
        %2552 = vxpose.xlu0.b32.cont [4/16] 0.0, 128
        %2553 = vxpose.xlu0.b32.cont [5/16] 0.0, 128
        %2554 = vxpose.xlu0.b32.cont [6/16] 0.0, 128
        %2555 = vxpose.xlu0.b32.cont [7/16] 0.0, 128
        %2556 = vxpose.xlu0.b32.cont [8/16] 0.0, 128
        %2557 = vxpose.xlu0.b32.cont [9/16] 0.0, 128
        %2558 = vxpose.xlu0.b32.cont [10/16] 0.0, 128
        %2559 = vxpose.xlu0.b32.cont [11/16] 0.0, 128
        %2560 = vxpose.xlu0.b32.cont [12/16] 0.0, 128
        %2561 = vxpose.xlu0.b32.cont [13/16] 0.0, 128
        %2562 = vxpose.xlu0.b32.cont [14/16] 0.0, 128
        %2563 = vxpose.xlu0.b32.cont [15/16] 0.0, 128
        %2564 = vxpose.xlu0.b32.end [16/16] 0.0, 128
        %v2565 = vpop.trf.xlu0
        %v2566 = vpop.trf.xlu0
        %v2567 = vpop.trf.xlu0
        %v2568 = vpop.trf.xlu0
        %v2569 = vpop.trf.xlu0
        %v2570 = vpop.trf.xlu0
        %v2571 = vpop.trf.xlu0
        %v2572 = vpop.trf.xlu0
        %v2573 = vpop.trf.xlu0
        %v2574 = vpop.trf.xlu0
        %v2575 = vpop.trf.xlu0
        %v2576 = vpop.trf.xlu0
        %v2577 = vpop.trf.xlu0
        %v2578 = vpop.trf.xlu0
        %v2579 = vpop.trf.xlu0
        %v2580 = vpop.trf.xlu0
        %v2582 = vsel %vm669, %v2565, 0
        %2584 = vmatprep.subr.mxu0 0.0
        %2585 = vmatpush1.msra.mxu0 0.0
        %2586 = vmatprep.subr.mxu0 0.0
        %2587 = vmatpush1.msra.mxu0 0.0
        %2588 = vmatprep.subr.mxu0 0.0
        %2589 = vmatpush1.msra.mxu0 0.0
        %2590 = vmatprep.subr.mxu0 0.0
        %2591 = vmatpush1.msra.mxu0 0.0
        %2592 = vmatprep.subr.mxu0 0.0
        %2593 = vmatpush1.msra.mxu0 0.0
        %2594 = vmatprep.subr.mxu0 0.0
        %2595 = vmatpush1.msra.mxu0 0.0
        %2596 = vmatprep.subr.mxu0 0.0
        %2597 = vmatpush1.msra.mxu0 0.0
        %2598 = vmatprep.subr.mxu0 0.0
        %2599 = vmatpush1.msra.mxu0 0.0
        %2600 = vmatprep.subr.mxu0 0.0
        %2601 = vmatpush1.msra.mxu0 0.0
        %2602 = vmatprep.subr.mxu0 0.0
        %2603 = vmatpush1.msra.mxu0 0.0
        %2604 = vmatprep.subr.mxu0 0.0
        %2605 = vmatpush1.msra.mxu0 0.0
        %2606 = vmatprep.subr.mxu0 0.0
        %2607 = vmatpush1.msra.mxu0 0.0
        %2608 = vmatprep.subr.mxu0 0.0
        %2609 = vmatpush1.msra.mxu0 0.0
        %2610 = vmatprep.subr.mxu0 0.0
        %2611 = vmatpush1.msra.mxu0 0.0
        %2612 = vmatprep.subr.mxu0 0.0
        %2613 = vmatpush1.msra.mxu0 0.0
        %2614 = vmatprep.subr.mxu0 0.0
        %2615 = vmatpush1.msra.mxu0 %v228
        %2616 = vmatprep.subr.mxu0 0.0
        %2617 = vmatpush2.msra.mxu0 0.0
        %2618 = vmatprep.subr.mxu0 0.0
        %2619 = vmatpush2.msra.mxu0 0.0
        %2620 = vmatprep.subr.mxu0 0.0
        %2621 = vmatpush2.msra.mxu0 0.0
        %2622 = vmatprep.subr.mxu0 0.0
        %2623 = vmatpush2.msra.mxu0 0.0
        %2624 = vmatprep.subr.mxu0 0.0
        %2625 = vmatpush2.msra.mxu0 0.0
        %2626 = vmatprep.subr.mxu0 0.0
        %2627 = vmatpush2.msra.mxu0 0.0
        %2628 = vmatprep.subr.mxu0 0.0
        %2629 = vmatpush2.msra.mxu0 0.0
        %2630 = vmatprep.subr.mxu0 0.0
        %2631 = vmatpush2.msra.mxu0 0.0
        %2632 = vmatprep.subr.mxu0 0.0
        %2633 = vmatpush2.msra.mxu0 0.0
        %2634 = vmatprep.subr.mxu0 0.0
        %2635 = vmatpush2.msra.mxu0 0.0
        %2636 = vmatprep.subr.mxu0 0.0
        %2637 = vmatpush2.msra.mxu0 0.0
        %2638 = vmatprep.subr.mxu0 0.0
        %2639 = vmatpush2.msra.mxu0 0.0
        %2640 = vmatprep.subr.mxu0 0.0
        %2641 = vmatpush2.msra.mxu0 0.0
        %2642 = vmatprep.subr.mxu0 0.0
        %2643 = vmatpush2.msra.mxu0 0.0
        %2644 = vmatprep.subr.mxu0 0.0
        %2645 = vmatpush2.msra.mxu0 0.0
        %2646 = vmatprep.subr.mxu0 0.0
        %2647 = vmatpush2.msra.mxu0 0.0
        %2648 = vmatprep.mubr.f32.mxu0 0.0
        %2649 = vmatmul.mubr.f32.gmra.mxu0 %v2582
        %v2650 = vpop.f32.mrf.mxu0
        %v2651 = vadd.f32 0.0, %v2650
        %v2652 = vpop.f32.mrf.mxu0
        %2653 = vdwg.mxu0
        %2654 = vst [vmem:[%s204] sm:$0xff] %v1076
        %2655 = vst [vmem:[%s204 + $0x8] sm:$0xff] %v1181
        %2656 = vst [vmem:[%s204 + $0x10] sm:$0xff] %v1286
        %2657 = vst [vmem:[%s204 + $0x18] sm:$0xff] %v1391
        %2658 = vst [vmem:[%s204 + $0x20] sm:$0xff] %v1496
        %2659 = vst [vmem:[%s204 + $0x28] sm:$0xff] %v1601
        %2660 = vst [vmem:[%s204 + $0x30] sm:$0xff] %v1706
        %2661 = vst [vmem:[%s204 + $0x38] sm:$0xff] %v1811
        %2662 = vst [vmem:[%s204 + $0x40] sm:$0xff] %v1916
        %2663 = vst [vmem:[%s204 + $0x48] sm:$0xff] %v2021
        %2664 = vst [vmem:[%s204 + $0x50] sm:$0xff] %v2126
        %2665 = vst [vmem:[%s204 + $0x58] sm:$0xff] %v2231
        %2666 = vst [vmem:[%s204 + $0x60] sm:$0xff] %v2336
        %2667 = vst [vmem:[%s204 + $0x68] sm:$0xff] %v2441
        %2668 = vst [vmem:[%s204 + $0x70] sm:$0xff] %v2546
        %2669 = vst [vmem:[%s204 + $0x78] sm:$0xff] %v2651
        %s2670 = sand.u32 %s101, 1
        %s2671 = scalar_lea.sflag [#allocation4], %s2670
        %s2672 = sand.u32 %s101, 1
        %s2673 = smul.addr %s2672, 128
        %s2674 = scalar_lea.vmem [#allocation5], %s2673
        // Predicated region
        $region37: #{selective_attention.1} parent=31 // pred_check
          %p2675 = pneg %p111
        $region38: #{selective_attention.1} parent=31 // pred_check_branch
          %2677 = sbr.rel (%p2675) target = $region40
        $region39: #{selective_attention.1} parent=31 // pred_region
          %s2678 = smul.u32 16, %s20
          %s2680 = ssub.s32 2048, 2048
          %2681 = vsyncadd %s2671, %s2680
          %s2682 = smul.addr %s2678, 128
          %s2683 = scalar_lea.hbm %s3, %s2682
          %s2684 = sshll.u32 %s2674, 4
          %s2685 = int_to_ptr.vmem [resolvable:$true] %s2684
          %2690 = dma.vmem_to_hbm [thread:$0]  %s2685, 2048, %s2683, %s2671, 128, 128, 8
        $region40: #{selective_attention.1} parent=31 // pred_fallthru
          _
      $region32: #{selective_attention.1} parent=5 // pred_fallthru
        _
      %p2691 = scmp.le.s32.totalorder 2, %s15
      // Predicated region
      $region41: #{selective_attention.1} parent=5 // pred_check
        %p2692 = pneg %p2691
      $region42: #{selective_attention.1} parent=5 // pred_check_branch
        %2694 = sbr.rel (%p2692) target = $region44
      $region43: #{selective_attention.1} parent=5 // pred_region
        %s2695 = ssub.s32 %s15, 2
        // Predicated region
        $region45: #{selective_attention.1} parent=43 // pred_check
          %p2696 = pneg %p117
        $region46: #{selective_attention.1} parent=43 // pred_check_branch
          %2698 = sbr.rel (%p2696) target = $region48
        $region47: #{selective_attention.1} parent=43 // pred_region
          %s2699 = sand.u32 %s102, 1
          %s2700 = scalar_lea.sflag [#allocation4], %s2699
          %s2701 = sand.u32 %s102, 1
          %s2702 = smul.addr %s2701, 128
          %s2703 = scalar_lea.vmem [#allocation5], %s2702
          %2704 = dma.done %s2700, 2048
        $region48: #{selective_attention.1} parent=43 // pred_fallthru
          _
      $region44: #{selective_attention.1} parent=5 // pred_fallthru
        _
    $region6: #{selective_attention.1} parent=1 // loop_footer
      %s19 = sadd.s32 1, %s15
    $region7: #{selective_attention.1} parent=1 // loop_footer_branch
      %14 = sbr.rel target = $region3
    $region8: #{selective_attention.1} parent=1 // loop_exit
      _
    %2705 = vsyncpa [#allocation3], 1
    %s2706 = scalar_lea.sflag [#allocation3], 1
    %2707 = vsyncpa %s2706, 1
    %2708 = vsyncpa [#allocation4], 1
    %s2709 = scalar_lea.sflag [#allocation4], 1
    %2710 = vsyncpa %s2709, 1

</llo_original>
